<compile_context>
chip_gen: v7x
topology: tpu7x:2x2x1
jax: 0.10.0
libtpu: 0.0.40
codegen_flags: <defaults>
</compile_context>

<pallas_src>
import math
import functools

import jax
import jax.numpy as jnp
from jax import lax
from jax.experimental import pallas as pl
from jax.experimental.pallas import tpu as pltpu


def mha_kernel(x_ref, wqkv_ref, bqkv_ref, wo_ref, bo_ref, mask_ref, kpm_ref,
               out_ref, *, num_heads, d_k):
    """One grid step = one batch element; heads are a static (unrolled) loop."""
    D = num_heads * d_k
    x = x_ref[0]                                            # (S, D) compute dtype

    # Fused Q/K/V projection: a single wide MXU pass with N = 3*D
    # (instead of 3 narrow passes with N = d_k).
    qkv = jnp.dot(x, wqkv_ref[...], preferred_element_type=jnp.float32)
    qkv = (qkv + bqkv_ref[...]).astype(x.dtype)             # (S, 3D)

    # Combined keep-mask, computed once per batch step (head-invariant):
    # masked iff attn_mask == 0 OR key_padding_mask == 0 (set-to -1e9 semantics,
    # exactly matching torch.masked_fill).
    keep = jnp.logical_and(mask_ref[...] != 0.0, kpm_ref[0] != 0.0)   # (S, S)

    neg_inf = jnp.float32(-1000000000.0)
    parts = []
    for h in range(num_heads):                              # static unroll over heads
        q = qkv[:, h * d_k:(h + 1) * d_k]                   # 1/sqrt(d_k) already in W_q
        k = qkv[:, D + h * d_k:D + (h + 1) * d_k]
        v = qkv[:, 2 * D + h * d_k:2 * D + (h + 1) * d_k]

        # scores = q @ k^T (contract over d_k), f32 accumulation
        scores = lax.dot_general(q, k, (((1,), (1,)), ((), ())),
                                 preferred_element_type=jnp.float32)  # (S, S)
        scores = jnp.where(keep, scores, neg_inf)

        # softmax stats in f32; normalization applied to (S, d_k) ctx, not (S, S)
        m = jnp.max(scores, axis=-1, keepdims=True)
        p = jnp.exp(scores - m)
        l = jnp.sum(p, axis=-1, keepdims=True)
        # TODO(synk): nn.Dropout(0.1) on attention weights is identity at inference;
        # training-mode dropout would need pltpu.prng_* based masking.
        ctx = jnp.dot(p.astype(x.dtype), v, preferred_element_type=jnp.float32)
        ctx = ctx * (1.0 / l)                               # (S, d_k)
        parts.append(ctx.astype(x.dtype))

    ctx_all = jnp.concatenate(parts, axis=-1)               # (S, D)

    # Single full-width output projection: (S, D) @ (D, D) + b_o, stored once.
    out = jnp.dot(ctx_all, wo_ref[...], preferred_element_type=jnp.float32)
    out_ref[0] = (out + bo_ref[...]).astype(out_ref.dtype)


def multi_head_attention(x, params, key_padding_mask, attn_mask, num_heads,
                         compute_dtype=jnp.bfloat16):
    B, S, D = x.shape
    H = num_heads
    dk = D // H
    scale = 1.0 / math.sqrt(dk)

    # Fold the 1/sqrt(d_k) score scale into W_q / b_q and fuse Q/K/V weights into
    # a single (D, 3D) operand so the projection is one MXU pass per batch step.
    wqkv = jnp.concatenate(
        [params["wq"] * scale, params["wk"], params["wv"]], axis=1
    ).astype(compute_dtype)                                  # (D, 3D)
    bqkv = jnp.concatenate(
        [params["bq"] * scale, params["bk"], params["bv"]]
    ).reshape(1, 3 * D).astype(jnp.float32)                  # (1, 3D)
    wo = params["wo"].astype(compute_dtype)                  # (D, D)
    bo = params["bo"].reshape(1, D).astype(jnp.float32)      # (1, D)

    x_c = x.astype(compute_dtype)
    am = attn_mask.astype(jnp.float32)                       # (S, S)
    kpm = key_padding_mask.reshape(B, 1, S).astype(jnp.float32)

    kernel = functools.partial(mha_kernel, num_heads=H, d_k=dk)

    # TODO(synk): for long sequences, add flash-style query/key tiling (online
    # softmax with m/l/acc scratch) so the (S, S) scores never materialize; at the
    # module's seq_length=20 the full block trivially fits VMEM on v5e/v6e/v7x.
    return pl.pallas_call(
        kernel,
        out_shape=jax.ShapeDtypeStruct((B, S, D), jnp.float32),
        grid_spec=pltpu.PrefetchScalarGridSpec(
            num_scalar_prefetch=0,
            grid=(B,),
            in_specs=[
                pl.BlockSpec((1, S, D), lambda b: (b, 0, 0)),   # x
                pl.BlockSpec((D, 3 * D), lambda b: (0, 0)),     # fused W_qkv
                pl.BlockSpec((1, 3 * D), lambda b: (0, 0)),     # fused b_qkv
                pl.BlockSpec((D, D), lambda b: (0, 0)),         # W_o (full width)
                pl.BlockSpec((1, D), lambda b: (0, 0)),         # b_o
                pl.BlockSpec((S, S), lambda b: (0, 0)),         # attn_mask
                pl.BlockSpec((1, 1, S), lambda b: (b, 0, 0)),   # key_padding_mask
            ],
            out_specs=pl.BlockSpec((1, S, D), lambda b: (b, 0, 0)),
        ),
        compiler_params=pltpu.CompilerParams(
            dimension_semantics=("parallel",),
            vmem_limit_bytes=64 * 1024 * 1024),
    )(x_c, wqkv, bqkv, wo, bo, am, kpm)


def reference_mha(x, params, key_padding_mask, attn_mask, num_heads):
    """Pure-JAX f32 reference matching the PyTorch forward (dropout in eval mode)."""
    B, S, D = x.shape
    H = num_heads
    dk = D // H
    q = x @ params["wq"] + params["bq"]
    k = x @ params["wk"] + params["bk"]
    v = x @ params["wv"] + params["bv"]

    def split(t):
        return t.reshape(B, S, H, dk).transpose(0, 2, 1, 3)

    Q, K, V = split(q), split(k), split(v)
    scores = jnp.einsum("bhqd,bhkd->bhqk", Q, K) / math.sqrt(dk)
    scores = jnp.where(attn_mask[None, None] == 0, -1000000000.0, scores)
    scores = jnp.where(key_padding_mask[:, None, None, :] == 0, -1000000000.0, scores)
    attn = jax.nn.softmax(scores, axis=-1)
    ctx = jnp.einsum("bhqk,bhkd->bhqd", attn, V)
    ctx = ctx.transpose(0, 2, 1, 3).reshape(B, S, D)
    return ctx @ params["wo"] + params["bo"]


if __name__ == "__main__":
    # Small shapes consistent with the module (d_model divisible by num_heads).
    B, S, D, H = 2, 16, 64, 4

    key = jax.random.PRNGKey(0)
    ks = jax.random.split(key, 10)
    params = {
        "wq": jax.random.normal(ks[0], (D, D), jnp.float32) * 0.05,
        "bq": jax.random.normal(ks[1], (D,), jnp.float32) * 0.05,
        "wk": jax.random.normal(ks[2], (D, D), jnp.float32) * 0.05,
        "bk": jax.random.normal(ks[3], (D,), jnp.float32) * 0.05,
        "wv": jax.random.normal(ks[4], (D, D), jnp.float32) * 0.05,
        "bv": jax.random.normal(ks[5], (D,), jnp.float32) * 0.05,
        "wo": jax.random.normal(ks[6], (D, D), jnp.float32) * 0.05,
        "bo": jax.random.normal(ks[7], (D,), jnp.float32) * 0.05,
    }

    x = jax.random.uniform(ks[8], (B, S, D), jnp.float32)
    # causal attention mask (seq, seq)
    attn_mask = jnp.tril(jnp.ones((S, S), jnp.float32))
    # key padding mask (batch, seq): last two key positions masked out
    key_padding_mask = jnp.ones((B, S), jnp.float32).at[:, -2:].set(0.0)

    ref = reference_mha(x, params, key_padding_mask, attn_mask, H)

    # 1) exact-dtype path (f32 operands): tight correctness check
    out_f32 = multi_head_attention(x, params, key_padding_mask, attn_mask, H,
                                   compute_dtype=jnp.float32)
    out_f32 = jax.block_until_ready(out_f32)
    assert out_f32.shape == (B, S, D)
    assert jnp.allclose(out_f32, ref, atol=1e-3, rtol=1e-3), (
        f"f32 path max abs diff {jnp.max(jnp.abs(out_f32 - ref))}")

    # 2) default perf path (bf16 MXU operands, f32 softmax/accumulation)
    out_bf16 = multi_head_attention(x, params, key_padding_mask, attn_mask, H)
    out_bf16 = jax.block_until_ready(out_bf16)
    assert out_bf16.shape == (B, S, D)
    assert jnp.allclose(out_bf16, ref, atol=2e-2, rtol=2e-2), (
        f"bf16 path max abs diff {jnp.max(jnp.abs(out_bf16 - ref))}")

    print("KERNEL_OK")
</pallas_src>

<mosaic_0001>
module attributes {stable_mosaic.version = 11 : i64} {
  func.func @mha_kernel(%arg0: i32, %arg1: memref<1x16x64xf32, #tpu.memory_space<vmem>>, %arg2: memref<64x192xf32, #tpu.memory_space<vmem>>, %arg3: memref<1x192xf32, #tpu.memory_space<vmem>>, %arg4: memref<64x64xf32, #tpu.memory_space<vmem>>, %arg5: memref<1x64xf32, #tpu.memory_space<vmem>>, %arg6: memref<16x16xf32, #tpu.memory_space<vmem>>, %arg7: memref<1x1x16xf32, #tpu.memory_space<vmem>>, %arg8: memref<1x16x64xf32, #tpu.memory_space<vmem>>) attributes {dimension_semantics = [#tpu.dimension_semantics<parallel>], iteration_bounds = array<i64: 2>, scalar_prefetch = 0 : i64, scratch_operands = 0 : i64, tpu.core_type = #tpu.core_type<tc>, window_params = [{transform_indices = @transform_0, window_bounds = array<i64: 1, 16, 64>}, {pipeline_mode = #tpu.pipeline_mode<synchronous>, transform_indices = @transform_1, window_bounds = array<i64: 64, 192>}, {pipeline_mode = #tpu.pipeline_mode<synchronous>, transform_indices = @transform_2, window_bounds = array<i64: 1, 192>}, {pipeline_mode = #tpu.pipeline_mode<synchronous>, transform_indices = @transform_3, window_bounds = array<i64: 64, 64>}, {pipeline_mode = #tpu.pipeline_mode<synchronous>, transform_indices = @transform_4, window_bounds = array<i64: 1, 64>}, {pipeline_mode = #tpu.pipeline_mode<synchronous>, transform_indices = @transform_5, window_bounds = array<i64: 16, 16>}, {transform_indices = @transform_6, window_bounds = array<i64: 1, 1, 16>}, {transform_indices = @transform_7, window_bounds = array<i64: 1, 16, 64>}]} {
    %c0 = arith.constant 0 : index
    %c0_0 = arith.constant 0 : index
    %c0_1 = arith.constant 0 : index
    %0 = vector.load %arg1[%c0, %c0_0, %c0_1] : memref<1x16x64xf32, #tpu.memory_space<vmem>>, vector<1x16x64xf32>
    %1 = vector.shape_cast %0 : vector<1x16x64xf32> to vector<16x64xf32>
    %c0_2 = arith.constant 0 : index
    %c0_3 = arith.constant 0 : index
    %2 = vector.load %arg2[%c0_2, %c0_3] : memref<64x192xf32, #tpu.memory_space<vmem>>, vector<64x192xf32>
    %cst = arith.constant dense<0.000000e+00> : vector<16x192xf32>
    %3 = tpu.matmul %1, %2, %cst {dimension_numbers = #tpu.dot_dimension_numbers<[1], [0], [0], [1], [0, 0, 1, 1], [], []>} : vector<16x64xf32>, vector<64x192xf32>, vector<16x192xf32> -> vector<16x192xf32>
    %c0_4 = arith.constant 0 : index
    %c0_5 = arith.constant 0 : index
    %4 = vector.load %arg3[%c0_4, %c0_5] : memref<1x192xf32, #tpu.memory_space<vmem>>, vector<1x192xf32>
    %5 = vector.broadcast %4 : vector<1x192xf32> to vector<16x192xf32>
    %6 = arith.addf %3, %5 : vector<16x192xf32>
    %c0_6 = arith.constant 0 : index
    %c0_7 = arith.constant 0 : index
    %7 = vector.load %arg6[%c0_6, %c0_7] : memref<16x16xf32, #tpu.memory_space<vmem>>, vector<16x16xf32>
    %cst_8 = arith.constant 0.000000e+00 : f32
    %8 = vector.broadcast %cst_8 : f32 to vector<16x16xf32>
    %9 = arith.cmpf one, %7, %8 : vector<16x16xf32>
    %c0_9 = arith.constant 0 : index
    %c0_10 = arith.constant 0 : index
    %c0_11 = arith.constant 0 : index
    %10 = vector.load %arg7[%c0_9, %c0_10, %c0_11] : memref<1x1x16xf32, #tpu.memory_space<vmem>>, vector<1x1x16xf32>
    %11 = vector.shape_cast %10 : vector<1x1x16xf32> to vector<1x16xf32>
    %cst_12 = arith.constant 0.000000e+00 : f32
    %12 = vector.broadcast %cst_12 : f32 to vector<1x16xf32>
    %13 = arith.cmpf one, %11, %12 : vector<1x16xf32>
    %14 = vector.broadcast %13 : vector<1x16xi1> to vector<16x16xi1>
    %15 = arith.andi %9, %14 : vector<16x16xi1>
    %16 = vector.extract_strided_slice %6 {offsets = [0, 0], sizes = [16, 16], strides = [1, 1]} : vector<16x192xf32> to vector<16x16xf32>
    %17 = vector.extract_strided_slice %6 {offsets = [0, 64], sizes = [16, 16], strides = [1, 1]} : vector<16x192xf32> to vector<16x16xf32>
    %18 = vector.extract_strided_slice %6 {offsets = [0, 128], sizes = [16, 16], strides = [1, 1]} : vector<16x192xf32> to vector<16x16xf32>
    %cst_13 = arith.constant dense<0.000000e+00> : vector<16x16xf32>
    %19 = tpu.matmul %16, %17, %cst_13 {dimension_numbers = #tpu.dot_dimension_numbers<[1], [1], [0], [0], [0, 0, 1, 0], [], []>} : vector<16x16xf32>, vector<16x16xf32>, vector<16x16xf32> -> vector<16x16xf32>
    %cst_14 = arith.constant -1.000000e+09 : f32
    %20 = vector.broadcast %cst_14 : f32 to vector<16x16xf32>
    %21 = arith.select %15, %19, %20 : vector<16x16xi1>, vector<16x16xf32>
    %cst_15 = arith.constant dense<0xFF800000> : vector<16xf32>
    %22 = vector.multi_reduction <maximumf>, %21, %cst_15 [1] : vector<16x16xf32> to vector<16xf32>
    %23 = vector.shape_cast %22 : vector<16xf32> to vector<16x1xf32>
    %24 = vector.broadcast %23 : vector<16x1xf32> to vector<16x16xf32>
    %25 = arith.subf %21, %24 : vector<16x16xf32>
    %26 = math.exp %25 : vector<16x16xf32>
    %cst_16 = arith.constant dense<0.000000e+00> : vector<16xf32>
    %27 = vector.multi_reduction <add>, %26, %cst_16 [1] : vector<16x16xf32> to vector<16xf32>
    %28 = vector.shape_cast %27 : vector<16xf32> to vector<16x1xf32>
    %cst_17 = arith.constant dense<0.000000e+00> : vector<16x16xf32>
    %29 = tpu.matmul %26, %18, %cst_17 {dimension_numbers = #tpu.dot_dimension_numbers<[1], [0], [0], [1], [0, 0, 1, 1], [], []>} : vector<16x16xf32>, vector<16x16xf32>, vector<16x16xf32> -> vector<16x16xf32>
    %cst_18 = arith.constant 1.000000e+00 : f32
    %30 = vector.broadcast %cst_18 : f32 to vector<16x1xf32>
    %31 = arith.divf %30, %28 : vector<16x1xf32>
    %32 = vector.broadcast %31 : vector<16x1xf32> to vector<16x16xf32>
    %33 = arith.mulf %29, %32 : vector<16x16xf32>
    %34 = vector.extract_strided_slice %6 {offsets = [0, 16], sizes = [16, 16], strides = [1, 1]} : vector<16x192xf32> to vector<16x16xf32>
    %35 = vector.extract_strided_slice %6 {offsets = [0, 80], sizes = [16, 16], strides = [1, 1]} : vector<16x192xf32> to vector<16x16xf32>
    %36 = vector.extract_strided_slice %6 {offsets = [0, 144], sizes = [16, 16], strides = [1, 1]} : vector<16x192xf32> to vector<16x16xf32>
    %cst_19 = arith.constant dense<0.000000e+00> : vector<16x16xf32>
    %37 = tpu.matmul %34, %35, %cst_19 {dimension_numbers = #tpu.dot_dimension_numbers<[1], [1], [0], [0], [0, 0, 1, 0], [], []>} : vector<16x16xf32>, vector<16x16xf32>, vector<16x16xf32> -> vector<16x16xf32>
    %cst_20 = arith.constant -1.000000e+09 : f32
    %38 = vector.broadcast %cst_20 : f32 to vector<16x16xf32>
    %39 = arith.select %15, %37, %38 : vector<16x16xi1>, vector<16x16xf32>
    %cst_21 = arith.constant dense<0xFF800000> : vector<16xf32>
    %40 = vector.multi_reduction <maximumf>, %39, %cst_21 [1] : vector<16x16xf32> to vector<16xf32>
    %41 = vector.shape_cast %40 : vector<16xf32> to vector<16x1xf32>
    %42 = vector.broadcast %41 : vector<16x1xf32> to vector<16x16xf32>
    %43 = arith.subf %39, %42 : vector<16x16xf32>
    %44 = math.exp %43 : vector<16x16xf32>
    %cst_22 = arith.constant dense<0.000000e+00> : vector<16xf32>
    %45 = vector.multi_reduction <add>, %44, %cst_22 [1] : vector<16x16xf32> to vector<16xf32>
    %46 = vector.shape_cast %45 : vector<16xf32> to vector<16x1xf32>
    %cst_23 = arith.constant dense<0.000000e+00> : vector<16x16xf32>
    %47 = tpu.matmul %44, %36, %cst_23 {dimension_numbers = #tpu.dot_dimension_numbers<[1], [0], [0], [1], [0, 0, 1, 1], [], []>} : vector<16x16xf32>, vector<16x16xf32>, vector<16x16xf32> -> vector<16x16xf32>
    %cst_24 = arith.constant 1.000000e+00 : f32
    %48 = vector.broadcast %cst_24 : f32 to vector<16x1xf32>
    %49 = arith.divf %48, %46 : vector<16x1xf32>
    %50 = vector.broadcast %49 : vector<16x1xf32> to vector<16x16xf32>
    %51 = arith.mulf %47, %50 : vector<16x16xf32>
    %52 = vector.extract_strided_slice %6 {offsets = [0, 32], sizes = [16, 16], strides = [1, 1]} : vector<16x192xf32> to vector<16x16xf32>
    %53 = vector.extract_strided_slice %6 {offsets = [0, 96], sizes = [16, 16], strides = [1, 1]} : vector<16x192xf32> to vector<16x16xf32>
    %54 = vector.extract_strided_slice %6 {offsets = [0, 160], sizes = [16, 16], strides = [1, 1]} : vector<16x192xf32> to vector<16x16xf32>
    %cst_25 = arith.constant dense<0.000000e+00> : vector<16x16xf32>
    %55 = tpu.matmul %52, %53, %cst_25 {dimension_numbers = #tpu.dot_dimension_numbers<[1], [1], [0], [0], [0, 0, 1, 0], [], []>} : vector<16x16xf32>, vector<16x16xf32>, vector<16x16xf32> -> vector<16x16xf32>
    %cst_26 = arith.constant -1.000000e+09 : f32
    %56 = vector.broadcast %cst_26 : f32 to vector<16x16xf32>
    %57 = arith.select %15, %55, %56 : vector<16x16xi1>, vector<16x16xf32>
    %cst_27 = arith.constant dense<0xFF800000> : vector<16xf32>
    %58 = vector.multi_reduction <maximumf>, %57, %cst_27 [1] : vector<16x16xf32> to vector<16xf32>
    %59 = vector.shape_cast %58 : vector<16xf32> to vector<16x1xf32>
    %60 = vector.broadcast %59 : vector<16x1xf32> to vector<16x16xf32>
    %61 = arith.subf %57, %60 : vector<16x16xf32>
    %62 = math.exp %61 : vector<16x16xf32>
    %cst_28 = arith.constant dense<0.000000e+00> : vector<16xf32>
    %63 = vector.multi_reduction <add>, %62, %cst_28 [1] : vector<16x16xf32> to vector<16xf32>
    %64 = vector.shape_cast %63 : vector<16xf32> to vector<16x1xf32>
    %cst_29 = arith.constant dense<0.000000e+00> : vector<16x16xf32>
    %65 = tpu.matmul %62, %54, %cst_29 {dimension_numbers = #tpu.dot_dimension_numbers<[1], [0], [0], [1], [0, 0, 1, 1], [], []>} : vector<16x16xf32>, vector<16x16xf32>, vector<16x16xf32> -> vector<16x16xf32>
    %cst_30 = arith.constant 1.000000e+00 : f32
    %66 = vector.broadcast %cst_30 : f32 to vector<16x1xf32>
    %67 = arith.divf %66, %64 : vector<16x1xf32>
    %68 = vector.broadcast %67 : vector<16x1xf32> to vector<16x16xf32>
    %69 = arith.mulf %65, %68 : vector<16x16xf32>
    %70 = vector.extract_strided_slice %6 {offsets = [0, 48], sizes = [16, 16], strides = [1, 1]} : vector<16x192xf32> to vector<16x16xf32>
    %71 = vector.extract_strided_slice %6 {offsets = [0, 112], sizes = [16, 16], strides = [1, 1]} : vector<16x192xf32> to vector<16x16xf32>
    %72 = vector.extract_strided_slice %6 {offsets = [0, 176], sizes = [16, 16], strides = [1, 1]} : vector<16x192xf32> to vector<16x16xf32>
    %cst_31 = arith.constant dense<0.000000e+00> : vector<16x16xf32>
    %73 = tpu.matmul %70, %71, %cst_31 {dimension_numbers = #tpu.dot_dimension_numbers<[1], [1], [0], [0], [0, 0, 1, 0], [], []>} : vector<16x16xf32>, vector<16x16xf32>, vector<16x16xf32> -> vector<16x16xf32>
    %cst_32 = arith.constant -1.000000e+09 : f32
    %74 = vector.broadcast %cst_32 : f32 to vector<16x16xf32>
    %75 = arith.select %15, %73, %74 : vector<16x16xi1>, vector<16x16xf32>
    %cst_33 = arith.constant dense<0xFF800000> : vector<16xf32>
    %76 = vector.multi_reduction <maximumf>, %75, %cst_33 [1] : vector<16x16xf32> to vector<16xf32>
    %77 = vector.shape_cast %76 : vector<16xf32> to vector<16x1xf32>
    %78 = vector.broadcast %77 : vector<16x1xf32> to vector<16x16xf32>
    %79 = arith.subf %75, %78 : vector<16x16xf32>
    %80 = math.exp %79 : vector<16x16xf32>
    %cst_34 = arith.constant dense<0.000000e+00> : vector<16xf32>
    %81 = vector.multi_reduction <add>, %80, %cst_34 [1] : vector<16x16xf32> to vector<16xf32>
    %82 = vector.shape_cast %81 : vector<16xf32> to vector<16x1xf32>
    %cst_35 = arith.constant dense<0.000000e+00> : vector<16x16xf32>
    %83 = tpu.matmul %80, %72, %cst_35 {dimension_numbers = #tpu.dot_dimension_numbers<[1], [0], [0], [1], [0, 0, 1, 1], [], []>} : vector<16x16xf32>, vector<16x16xf32>, vector<16x16xf32> -> vector<16x16xf32>
    %cst_36 = arith.constant 1.000000e+00 : f32
    %84 = vector.broadcast %cst_36 : f32 to vector<16x1xf32>
    %85 = arith.divf %84, %82 : vector<16x1xf32>
    %86 = vector.broadcast %85 : vector<16x1xf32> to vector<16x16xf32>
    %87 = arith.mulf %83, %86 : vector<16x16xf32>
    %88 = tpu.concatenate %33, %51, %69, %87 in 1 : vector<16x16xf32>, vector<16x16xf32>, vector<16x16xf32>, vector<16x16xf32> -> vector<16x64xf32>
    %c0_37 = arith.constant 0 : index
    %c0_38 = arith.constant 0 : index
    %89 = vector.load %arg4[%c0_37, %c0_38] : memref<64x64xf32, #tpu.memory_space<vmem>>, vector<64x64xf32>
    %cst_39 = arith.constant dense<0.000000e+00> : vector<16x64xf32>
    %90 = tpu.matmul %88, %89, %cst_39 {dimension_numbers = #tpu.dot_dimension_numbers<[1], [0], [0], [1], [0, 0, 1, 1], [], []>} : vector<16x64xf32>, vector<64x64xf32>, vector<16x64xf32> -> vector<16x64xf32>
    %c0_40 = arith.constant 0 : index
    %c0_41 = arith.constant 0 : index
    %91 = vector.load %arg5[%c0_40, %c0_41] : memref<1x64xf32, #tpu.memory_space<vmem>>, vector<1x64xf32>
    %92 = vector.broadcast %91 : vector<1x64xf32> to vector<16x64xf32>
    %93 = arith.addf %90, %92 : vector<16x64xf32>
    %c0_42 = arith.constant 0 : index
    %c0_43 = arith.constant 0 : index
    %c0_44 = arith.constant 0 : index
    %94 = vector.load %arg8[%c0_42, %c0_43, %c0_44] : memref<1x16x64xf32, #tpu.memory_space<vmem>>, vector<1x16x64xf32>
    %95 = vector.shape_cast %94 : vector<1x16x64xf32> to vector<16x64xf32>
    %96 = vector.shape_cast %93 : vector<16x64xf32> to vector<1x16x64xf32>
    tpu.vector_store %arg8[%c0_42, %c0_43, %c0_44], %96 {strides = array<i32>} : memref<1x16x64xf32, #tpu.memory_space<vmem>>, vector<1x16x64xf32>,
    return
  }
  func.func @transform_0(%arg0: i32) -> (i32, i32, i32) {
    %c0_i32 = arith.constant 0 : i32
    %c0_i32_0 = arith.constant 0 : i32
    %c0_i32_1 = arith.constant 0 : i32
    return %arg0, %c0_i32, %c0_i32_0 : i32, i32, i32
  }
  func.func @transform_1(%arg0: i32) -> (i32, i32) {
    %c0_i32 = arith.constant 0 : i32
    %c0_i32_0 = arith.constant 0 : i32
    %c0_i32_1 = arith.constant 0 : i32
    return %c0_i32, %c0_i32_0 : i32, i32
  }
  func.func @transform_2(%arg0: i32) -> (i32, i32) {
    %c0_i32 = arith.constant 0 : i32
    %c0_i32_0 = arith.constant 0 : i32
    %c0_i32_1 = arith.constant 0 : i32
    return %c0_i32, %c0_i32_0 : i32, i32
  }
  func.func @transform_3(%arg0: i32) -> (i32, i32) {
    %c0_i32 = arith.constant 0 : i32
    %c0_i32_0 = arith.constant 0 : i32
    %c0_i32_1 = arith.constant 0 : i32
    return %c0_i32, %c0_i32_0 : i32, i32
  }
  func.func @transform_4(%arg0: i32) -> (i32, i32) {
    %c0_i32 = arith.constant 0 : i32
    %c0_i32_0 = arith.constant 0 : i32
    %c0_i32_1 = arith.constant 0 : i32
    return %c0_i32, %c0_i32_0 : i32, i32
  }
  func.func @transform_5(%arg0: i32) -> (i32, i32) {
    %c0_i32 = arith.constant 0 : i32
    %c0_i32_0 = arith.constant 0 : i32
    %c0_i32_1 = arith.constant 0 : i32
    return %c0_i32, %c0_i32_0 : i32, i32
  }
  func.func @transform_6(%arg0: i32) -> (i32, i32, i32) {
    %c0_i32 = arith.constant 0 : i32
    %c0_i32_0 = arith.constant 0 : i32
    %c0_i32_1 = arith.constant 0 : i32
    return %arg0, %c0_i32, %c0_i32_0 : i32, i32, i32
  }
  func.func @transform_7(%arg0: i32) -> (i32, i32, i32) {
    %c0_i32 = arith.constant 0 : i32
    %c0_i32_0 = arith.constant 0 : i32
    %c0_i32_1 = arith.constant 0 : i32
    return %arg0, %c0_i32, %c0_i32_0 : i32, i32, i32
  }
}

</mosaic_0001>

<llo_original>
// kernel: tpu_custom_call.1
$region0: #{tpu_custom_call.1}
  #allocation0 [shape = 'u32[]', space=smem, size = 0x4, offset = 0x4, fixed_abs, tag = 'smem constant byte address 0x4 - core index']
  #allocation1 [shape = 'u32[144,128]{1,0:T(1,128)}', space=vmem, size = 0x12000, scoped, tag = 'internal scratch']
  %s0 = inlined_call_operand.hbm [shape: f32[2,16,64], index: 0, kind: input, shape index: {}]
  %s1 = inlined_call_operand.hbm [shape: f32[64,192], index: 1, kind: input, shape index: {}]
  %s2 = inlined_call_operand.hbm [shape: f32[1,192], index: 2, kind: input, shape index: {}]
  %s3 = inlined_call_operand.hbm [shape: f32[64,64], index: 3, kind: input, shape index: {}]
  %s4 = inlined_call_operand.hbm [shape: f32[1,64], index: 4, kind: input, shape index: {}]
  %s5 = inlined_call_operand.hbm [shape: f32[16,16], index: 5, kind: input, shape index: {}]
  %s6 = inlined_call_operand.hbm [shape: f32[2,1,16], index: 6, kind: input, shape index: {}]
  %s7 = inlined_call_operand.hbm [shape: f32[2,16,64], index: 7, kind: output, shape index: {}]
  %s8 = sld [smem:[#allocation0]]
  $region89: #{tpu_custom_call.1} parent=0
    _
  %s10 = ssub.s32 1, %s8
  %s11 = scalar_select 0, %s10, %s8
  $region1: #{tpu_custom_call.1} parent=0
    #allocation2 [shape = 'u8[16384]{0}', space=vmem, size = 0x4000, scoped, tag = 'input window, operand 0']
    #allocation3 [shape = 's32[2]{0}', space=sflag, size = 0x8, scoped, tag = 'scoped memory for tpu_custom_call.1']
    #allocation4 [shape = 's32[2]{0}', space=sflag, size = 0x8, scoped, tag = 'scoped memory for tpu_custom_call.1']
    #allocation5 [shape = 'u8[65536]{0}', space=vmem, size = 0x10000, scoped, tag = 'input window, operand 1, single buffered']
    #allocation6 [shape = 's32[1]{0}', space=sflag, size = 0x4, scoped, tag = 'scoped memory for tpu_custom_call.1']
    #allocation7 [shape = 'u8[1024]{0}', space=vmem, size = 0x400, scoped, tag = 'input window, operand 2, single buffered']
    #allocation8 [shape = 'u8[32768]{0}', space=vmem, size = 0x8000, scoped, tag = 'input window, operand 3, single buffered']
    #allocation9 [shape = 's32[1]{0}', space=sflag, size = 0x4, scoped, tag = 'scoped memory for tpu_custom_call.1']
    #allocation10 [shape = 'u8[512]{0}', space=vmem, size = 0x400, scoped, tag = 'input window, operand 4, single buffered']
    #allocation11 [shape = 'u8[8192]{0}', space=vmem, size = 0x2000, scoped, tag = 'input window, operand 5, single buffered']
    #allocation12 [shape = 's32[1]{0}', space=sflag, size = 0x4, scoped, tag = 'scoped memory for tpu_custom_call.1']
    #allocation13 [shape = 'u8[1024]{0}', space=vmem, size = 0x400, scoped, tag = 'input window, operand 6']
    #allocation14 [shape = 'u8[16384]{0}', space=vmem, size = 0x4000, scoped, tag = 'output window, operand 0']
    %12 = vsyncpa [#allocation3], 0
    %s13 = scalar_lea.sflag [#allocation3], 1
    %14 = vsyncpa %s13, 0
    %15 = vsyncpa [#allocation6], 0
    %16 = vsyncpa [#allocation9], 0
    %17 = vsyncpa [#allocation12], 0
    %18 = vsyncpa [#allocation4], 0
    %s19 = scalar_lea.sflag [#allocation4], 1
    %20 = vsyncpa %s19, 0
    loop: start=0, step=1, limit=4
    $region2: #{tpu_custom_call.1} parent=1 // loop_pre_header
      _
    $region3: #{tpu_custom_call.1} parent=1 // loop_header
      %s22 = sphi 0, %s26
      %p23 = scmp.ge.s32.totalorder %s22, 4
      %s32 = sphi 0, %s34
      %s35 = sphi 0, %s32
      %s36 = sphi 0, %s35
      %s52 = sphi 0, %s36
      %s56 = sphi 0, %s56
      %s58 = sphi 0, %s56
      %s59 = sphi 0, %s58
      %s73 = sphi 0, %s59
      %s77 = sphi 0, %s77
      %s79 = sphi 0, %s77
      %s80 = sphi 0, %s79
      %s94 = sphi 0, %s80
      %s98 = sphi 0, %s98
      %s100 = sphi 0, %s98
      %s101 = sphi 0, %s100
      %s115 = sphi 0, %s101
      %s119 = sphi 0, %s119
      %s121 = sphi 0, %s119
      %s122 = sphi 0, %s121
      %s136 = sphi 0, %s122
      %s140 = sphi 0, %s140
      %s142 = sphi 0, %s140
      %s143 = sphi 0, %s142
      %s157 = sphi 0, %s143
      %s163 = sphi 0, %s165
      %s166 = sphi 0, %s163
      %s167 = sphi 0, %s166
      %s183 = sphi 0, %s167
      %s189 = sphi 0, %s191
      %s192 = sphi 0, %s189
      %s193 = sphi 0, %s192
      %s209 = sphi 0, %s193
    $region4: #{tpu_custom_call.1} parent=1 // loop_header_branch
      %25 = sbr.rel (%p23) target = $region8
    $region5: #{tpu_custom_call.1} parent=1 // loop_body
      %s27 = ssub.s32 %s22, 1
      %s28 = ssub.s32 %s22, 2
      %s29 = sadd.s32 %s22, 1
      %s30 = ssub.s32 %s22, %s29
      %p31 = scmp.eq.s32.totalorder %s30, 0
      %s33 = sadd.s32 %s32, 1
      %s34 = scalar_select %p31, %s32, %s33
      %p37 = pneg %p31
      %p38 = scmp.eq.s32.totalorder %s22, 1
      %p39 = por %p37, %p38
      %p40 = scmp.ne.s32.totalorder %s32, %s35
      %p41 = scmp.eq.s32.totalorder %s22, 0
      %p42 = por %p40, %p41
      %p43 = scmp.ne.s32.totalorder %s32, %s35
      %p44 = scmp.eq.s32.totalorder %s27, 1
      %p45 = por %p43, %p44
      %p46 = scmp.ne.s32.totalorder %s35, %s36
      %p47 = scmp.eq.s32.totalorder %s27, 0
      %p48 = por %p46, %p47
      %p49 = scmp.ne.s32.totalorder %s35, %s36
      %p50 = scmp.eq.s32.totalorder %s28, 1
      %p51 = por %p49, %p50
      %p53 = scmp.ne.s32.totalorder %s36, %s52
      %p54 = scmp.eq.s32.totalorder %s28, 0
      %p55 = por %p53, %p54
      %s57 = sadd.s32 %s56, 1
      %p60 = scmp.eq.s32.totalorder %s22, 1
      %p61 = scmp.ne.s32.totalorder %s56, %s58
      %p62 = scmp.eq.s32.totalorder %s22, 0
      %p63 = por %p61, %p62
      %p64 = scmp.ne.s32.totalorder %s56, %s58
      %p65 = scmp.eq.s32.totalorder %s27, 1
      %p66 = por %p64, %p65
      %p67 = scmp.ne.s32.totalorder %s58, %s59
      %p68 = scmp.eq.s32.totalorder %s27, 0
      %p69 = por %p67, %p68
      %p70 = scmp.ne.s32.totalorder %s58, %s59
      %p71 = scmp.eq.s32.totalorder %s28, 1
      %p72 = por %p70, %p71
      %p74 = scmp.ne.s32.totalorder %s59, %s73
      %p75 = scmp.eq.s32.totalorder %s28, 0
      %p76 = por %p74, %p75
      %s78 = sadd.s32 %s77, 1
      %p81 = scmp.eq.s32.totalorder %s22, 1
      %p82 = scmp.ne.s32.totalorder %s77, %s79
      %p83 = scmp.eq.s32.totalorder %s22, 0
      %p84 = por %p82, %p83
      %p85 = scmp.ne.s32.totalorder %s77, %s79
      %p86 = scmp.eq.s32.totalorder %s27, 1
      %p87 = por %p85, %p86
      %p88 = scmp.ne.s32.totalorder %s79, %s80
      %p89 = scmp.eq.s32.totalorder %s27, 0
      %p90 = por %p88, %p89
      %p91 = scmp.ne.s32.totalorder %s79, %s80
      %p92 = scmp.eq.s32.totalorder %s28, 1
      %p93 = por %p91, %p92
      %p95 = scmp.ne.s32.totalorder %s80, %s94
      %p96 = scmp.eq.s32.totalorder %s28, 0
      %p97 = por %p95, %p96
      %s99 = sadd.s32 %s98, 1
      %p102 = scmp.eq.s32.totalorder %s22, 1
      %p103 = scmp.ne.s32.totalorder %s98, %s100
      %p104 = scmp.eq.s32.totalorder %s22, 0
      %p105 = por %p103, %p104
      %p106 = scmp.ne.s32.totalorder %s98, %s100
      %p107 = scmp.eq.s32.totalorder %s27, 1
      %p108 = por %p106, %p107
      %p109 = scmp.ne.s32.totalorder %s100, %s101
      %p110 = scmp.eq.s32.totalorder %s27, 0
      %p111 = por %p109, %p110
      %p112 = scmp.ne.s32.totalorder %s100, %s101
      %p113 = scmp.eq.s32.totalorder %s28, 1
      %p114 = por %p112, %p113
      %p116 = scmp.ne.s32.totalorder %s101, %s115
      %p117 = scmp.eq.s32.totalorder %s28, 0
      %p118 = por %p116, %p117
      %s120 = sadd.s32 %s119, 1
      %p123 = scmp.eq.s32.totalorder %s22, 1
      %p124 = scmp.ne.s32.totalorder %s119, %s121
      %p125 = scmp.eq.s32.totalorder %s22, 0
      %p126 = por %p124, %p125
      %p127 = scmp.ne.s32.totalorder %s119, %s121
      %p128 = scmp.eq.s32.totalorder %s27, 1
      %p129 = por %p127, %p128
      %p130 = scmp.ne.s32.totalorder %s121, %s122
      %p131 = scmp.eq.s32.totalorder %s27, 0
      %p132 = por %p130, %p131
      %p133 = scmp.ne.s32.totalorder %s121, %s122
      %p134 = scmp.eq.s32.totalorder %s28, 1
      %p135 = por %p133, %p134
      %p137 = scmp.ne.s32.totalorder %s122, %s136
      %p138 = scmp.eq.s32.totalorder %s28, 0
      %p139 = por %p137, %p138
      %s141 = sadd.s32 %s140, 1
      %p144 = scmp.eq.s32.totalorder %s22, 1
      %p145 = scmp.ne.s32.totalorder %s140, %s142
      %p146 = scmp.eq.s32.totalorder %s22, 0
      %p147 = por %p145, %p146
      %p148 = scmp.ne.s32.totalorder %s140, %s142
      %p149 = scmp.eq.s32.totalorder %s27, 1
      %p150 = por %p148, %p149
      %p151 = scmp.ne.s32.totalorder %s142, %s143
      %p152 = scmp.eq.s32.totalorder %s27, 0
      %p153 = por %p151, %p152
      %p154 = scmp.ne.s32.totalorder %s142, %s143
      %p155 = scmp.eq.s32.totalorder %s28, 1
      %p156 = por %p154, %p155
      %p158 = scmp.ne.s32.totalorder %s143, %s157
      %p159 = scmp.eq.s32.totalorder %s28, 0
      %p160 = por %p158, %p159
      %s161 = ssub.s32 %s22, %s29
      %p162 = scmp.eq.s32.totalorder %s161, 0
      %s164 = sadd.s32 %s163, 1
      %s165 = scalar_select %p162, %s163, %s164
      %p168 = pneg %p162
      %p169 = scmp.eq.s32.totalorder %s22, 1
      %p170 = por %p168, %p169
      %p171 = scmp.ne.s32.totalorder %s163, %s166
      %p172 = scmp.eq.s32.totalorder %s22, 0
      %p173 = por %p171, %p172
      %p174 = scmp.ne.s32.totalorder %s163, %s166
      %p175 = scmp.eq.s32.totalorder %s27, 1
      %p176 = por %p174, %p175
      %p177 = scmp.ne.s32.totalorder %s166, %s167
      %p178 = scmp.eq.s32.totalorder %s27, 0
      %p179 = por %p177, %p178
      %p180 = scmp.ne.s32.totalorder %s166, %s167
      %p181 = scmp.eq.s32.totalorder %s28, 1
      %p182 = por %p180, %p181
      %p184 = scmp.ne.s32.totalorder %s167, %s183
      %p185 = scmp.eq.s32.totalorder %s28, 0
      %p186 = por %p184, %p185
      %s187 = ssub.s32 %s22, %s29
      %p188 = scmp.eq.s32.totalorder %s187, 0
      %s190 = sadd.s32 %s189, 1
      %s191 = scalar_select %p188, %s189, %s190
      %p194 = pneg %p188
      %p195 = scmp.eq.s32.totalorder %s22, 1
      %p196 = por %p194, %p195
      %p197 = scmp.ne.s32.totalorder %s189, %s192
      %p198 = scmp.eq.s32.totalorder %s22, 0
      %p199 = por %p197, %p198
      %p200 = scmp.ne.s32.totalorder %s189, %s192
      %p201 = scmp.eq.s32.totalorder %s27, 1
      %p202 = por %p200, %p201
      %p203 = scmp.ne.s32.totalorder %s192, %s193
      %p204 = scmp.eq.s32.totalorder %s27, 0
      %p205 = por %p203, %p204
      %p206 = scmp.ne.s32.totalorder %s192, %s193
      %p207 = scmp.eq.s32.totalorder %s28, 1
      %p208 = por %p206, %p207
      %p210 = scmp.ne.s32.totalorder %s193, %s209
      %p211 = scmp.eq.s32.totalorder %s28, 0
      %p212 = por %p210, %p211
      %p213 = scmp.le.s32.totalorder 1, %s22
      %p214 = scmp.lt.s32.totalorder %s22, 3
      %p215 = pnand %p213, %p214
      %p216 = pneg %p215
      // Predicated region
      $region9: #{tpu_custom_call.1} parent=5 // pred_check
        _
      $region10: #{tpu_custom_call.1} parent=5 // pred_check_branch
        %218 = sbr.rel (%p215) target = $region12
      $region11: #{tpu_custom_call.1} parent=5 // pred_region
        %s219 = ssub.s32 %s22, 1
        // Predicated region
        $region13: #{tpu_custom_call.1} parent=11 // pred_check
          %p220 = pneg %p69
        $region14: #{tpu_custom_call.1} parent=11 // pred_check_branch
          %222 = sbr.rel (%p220) target = $region16
        $region15: #{tpu_custom_call.1} parent=11 // pred_region
          %s224 = ssub.s32 2048, 2048
          %225 = vsyncadd [#allocation6], %s224
          %s226 = sshll.u32 [#allocation5], 4
          %s227 = int_to_ptr.vmem [resolvable:$true] %s226
          %232 = dma.hbm_to_vmem [thread:$0]  %s1, 2048, %s227, [#allocation6], 256, 256, 16
        $region16: #{tpu_custom_call.1} parent=11 // pred_fallthru
          _
        // Predicated region
        $region17: #{tpu_custom_call.1} parent=11 // pred_check
          %p233 = pneg %p90
        $region18: #{tpu_custom_call.1} parent=11 // pred_check_branch
          %235 = sbr.rel (%p233) target = $region20
        $region19: #{tpu_custom_call.1} parent=11 // pred_region
          %s237 = ssub.s32 32, 32
          %238 = vsyncadd [#allocation6], %s237
          %s240 = sshll.u32 [#allocation7], 4
          %s241 = int_to_ptr.vmem [resolvable:$true] %s240
          %243 = dma.hbm_to_vmem [thread:$0]  %s2, 32, %s241, [#allocation6]
        $region20: #{tpu_custom_call.1} parent=11 // pred_fallthru
          _
        // Predicated region
        $region21: #{tpu_custom_call.1} parent=11 // pred_check
          %p244 = pneg %p111
        $region22: #{tpu_custom_call.1} parent=11 // pred_check_branch
          %246 = sbr.rel (%p244) target = $region24
        $region23: #{tpu_custom_call.1} parent=11 // pred_region
          %s248 = ssub.s32 1024, 1024
          %249 = vsyncadd [#allocation9], %s248
          %s250 = sshll.u32 [#allocation8], 4
          %s251 = int_to_ptr.vmem [resolvable:$true] %s250
          %256 = dma.hbm_to_vmem [thread:$0]  %s3, 1024, %s251, [#allocation9], 128, 128, 8
        $region24: #{tpu_custom_call.1} parent=11 // pred_fallthru
          _
        // Predicated region
        $region25: #{tpu_custom_call.1} parent=11 // pred_check
          %p257 = pneg %p132
        $region26: #{tpu_custom_call.1} parent=11 // pred_check_branch
          %259 = sbr.rel (%p257) target = $region28
        $region27: #{tpu_custom_call.1} parent=11 // pred_region
          %s261 = ssub.s32 16, 16
          %262 = vsyncadd [#allocation9], %s261
          %s264 = sshll.u32 [#allocation10], 4
          %s265 = int_to_ptr.vmem [resolvable:$true] %s264
          %267 = dma.hbm_to_vmem [thread:$0]  %s4, 16, %s265, [#allocation9]
        $region28: #{tpu_custom_call.1} parent=11 // pred_fallthru
          _
        // Predicated region
        $region29: #{tpu_custom_call.1} parent=11 // pred_check
          %p268 = pneg %p153
        $region30: #{tpu_custom_call.1} parent=11 // pred_check_branch
          %270 = sbr.rel (%p268) target = $region32
        $region31: #{tpu_custom_call.1} parent=11 // pred_region
          %s272 = ssub.s32 256, 256
          %273 = vsyncadd [#allocation12], %s272
          %s274 = sshll.u32 [#allocation11], 4
          %s275 = int_to_ptr.vmem [resolvable:$true] %s274
          %280 = dma.hbm_to_vmem [thread:$0]  %s5, 256, %s275, [#allocation12], 128, 128, 8
        $region32: #{tpu_custom_call.1} parent=11 // pred_fallthru
          _
      $region12: #{tpu_custom_call.1} parent=5 // pred_fallthru
        _
      %p281 = scmp.lt.s32.totalorder %s22, 2
      // Predicated region
      $region33: #{tpu_custom_call.1} parent=5 // pred_check
        %p282 = pneg %p281
      $region34: #{tpu_custom_call.1} parent=5 // pred_check_branch
        %284 = sbr.rel (%p282) target = $region36
      $region35: #{tpu_custom_call.1} parent=5 // pred_region
        // Predicated region
        $region37: #{tpu_custom_call.1} parent=35 // pred_check
          %p285 = pneg %p42
        $region38: #{tpu_custom_call.1} parent=35 // pred_check_branch
          %287 = sbr.rel (%p285) target = $region40
        $region39: #{tpu_custom_call.1} parent=35 // pred_region
          %s288 = sand.u32 %s22, 1
          %s289 = scalar_lea.sflag [#allocation3], %s288
          %s290 = sand.u32 %s32, 1
          %s291 = smul.addr %s290, 16
          %s292 = scalar_lea.vmem [#allocation2], %s291
          %s294 = ssub.s32 256, 256
          %295 = vsyncadd %s289, %s294
          %s296 = smul.addr %s22, 2
          %s297 = smul.addr %s296, 128
          %s298 = scalar_lea.hbm %s0, %s297
          %s299 = sshll.u32 %s292, 4
          %s300 = int_to_ptr.vmem [resolvable:$true] %s299
          %305 = dma.hbm_to_vmem [thread:$0]  %s298, 256, %s300, %s289, 128, 128, 8
        $region40: #{tpu_custom_call.1} parent=35 // pred_fallthru
          _
        // Predicated region
        $region41: #{tpu_custom_call.1} parent=35 // pred_check
          %p306 = pneg %p173
        $region42: #{tpu_custom_call.1} parent=35 // pred_check_branch
          %308 = sbr.rel (%p306) target = $region44
        $region43: #{tpu_custom_call.1} parent=35 // pred_region
          %s309 = sand.u32 %s22, 1
          %s310 = scalar_lea.sflag [#allocation3], %s309
          %s311 = sand.u32 %s163, 1
          %s312 = scalar_lea.vmem [#allocation13], %s311
          %s314 = ssub.s32 16, 16
          %315 = vsyncadd %s310, %s314
          %s316 = smul.addr %s22, 16
          %s317 = scalar_lea.hbm %s6, %s316
          %s319 = sshll.u32 %s312, 4
          %s320 = int_to_ptr.vmem [resolvable:$true] %s319
          %322 = dma.hbm_to_vmem [thread:$0]  %s317, 16, %s320, %s310
        $region44: #{tpu_custom_call.1} parent=35 // pred_fallthru
          _
      $region36: #{tpu_custom_call.1} parent=5 // pred_fallthru
        _
      %p323 = scmp.le.s32.totalorder 1, %s22
      %p324 = scmp.lt.s32.totalorder %s22, 3
      %p325 = pnand %p323, %p324
      %p326 = pneg %p325
      // Predicated region
      $region45: #{tpu_custom_call.1} parent=5 // pred_check
        _
      $region46: #{tpu_custom_call.1} parent=5 // pred_check_branch
        %328 = sbr.rel (%p325) target = $region48
      $region47: #{tpu_custom_call.1} parent=5 // pred_region
        %s329 = ssub.s32 %s22, 1
        %s330 = sand.u32 %s27, 1
        %s331 = scalar_lea.sflag [#allocation3], %s330
        %s332 = sand.u32 %s35, 1
        %s333 = smul.addr %s332, 16
        %s334 = scalar_lea.vmem [#allocation2], %s333
        // Predicated region
        $region49: #{tpu_custom_call.1} parent=47 // pred_check
          %p335 = pneg %p48
        $region50: #{tpu_custom_call.1} parent=47 // pred_check_branch
          %337 = sbr.rel (%p335) target = $region52
        $region51: #{tpu_custom_call.1} parent=47 // pred_region
          %338 = dma.done %s331, 256
        $region52: #{tpu_custom_call.1} parent=47 // pred_fallthru
          _
        // Predicated region
        $region53: #{tpu_custom_call.1} parent=47 // pred_check
          %p339 = pneg %p69
        $region54: #{tpu_custom_call.1} parent=47 // pred_check_branch
          %341 = sbr.rel (%p339) target = $region56
        $region55: #{tpu_custom_call.1} parent=47 // pred_region
          %342 = dma.done [#allocation6], 2048
        $region56: #{tpu_custom_call.1} parent=47 // pred_fallthru
          _
        // Predicated region
        $region57: #{tpu_custom_call.1} parent=47 // pred_check
          %p343 = pneg %p90
        $region58: #{tpu_custom_call.1} parent=47 // pred_check_branch
          %345 = sbr.rel (%p343) target = $region60
        $region59: #{tpu_custom_call.1} parent=47 // pred_region
          %346 = dma.done [#allocation6], 32
        $region60: #{tpu_custom_call.1} parent=47 // pred_fallthru
          _
        // Predicated region
        $region61: #{tpu_custom_call.1} parent=47 // pred_check
          %p347 = pneg %p111
        $region62: #{tpu_custom_call.1} parent=47 // pred_check_branch
          %349 = sbr.rel (%p347) target = $region64
        $region63: #{tpu_custom_call.1} parent=47 // pred_region
          %350 = dma.done [#allocation9], 1024
        $region64: #{tpu_custom_call.1} parent=47 // pred_fallthru
          _
        // Predicated region
        $region65: #{tpu_custom_call.1} parent=47 // pred_check
          %p351 = pneg %p132
        $region66: #{tpu_custom_call.1} parent=47 // pred_check_branch
          %353 = sbr.rel (%p351) target = $region68
        $region67: #{tpu_custom_call.1} parent=47 // pred_region
          %354 = dma.done [#allocation9], 16
        $region68: #{tpu_custom_call.1} parent=47 // pred_fallthru
          _
        // Predicated region
        $region69: #{tpu_custom_call.1} parent=47 // pred_check
          %p355 = pneg %p153
        $region70: #{tpu_custom_call.1} parent=47 // pred_check_branch
          %357 = sbr.rel (%p355) target = $region72
        $region71: #{tpu_custom_call.1} parent=47 // pred_region
          %358 = dma.done [#allocation12], 256
        $region72: #{tpu_custom_call.1} parent=47 // pred_fallthru
          _
        %s359 = sand.u32 %s27, 1
        %s360 = scalar_lea.sflag [#allocation3], %s359
        %s361 = sand.u32 %s166, 1
        %s362 = scalar_lea.vmem [#allocation13], %s361
        // Predicated region
        $region73: #{tpu_custom_call.1} parent=47 // pred_check
          %p363 = pneg %p179
        $region74: #{tpu_custom_call.1} parent=47 // pred_check_branch
          %365 = sbr.rel (%p363) target = $region76
        $region75: #{tpu_custom_call.1} parent=47 // pred_region
          %366 = dma.done %s360, 16
        $region76: #{tpu_custom_call.1} parent=47 // pred_fallthru
          _
        %s367 = sand.u32 %s27, 1
        %s368 = scalar_lea.sflag [#allocation3], %s367
        %s369 = sand.u32 %s35, 1
        %s370 = smul.addr %s369, 16
        %s371 = scalar_lea.vmem [#allocation2], %s370
        %p372 = pneg %p48
        %p373 = pneg %p45
        %p374 = pneg %p69
        %p375 = pneg %p66
        %p376 = pneg %p90
        %p377 = pneg %p87
        %p378 = pneg %p111
        %p379 = pneg %p108
        %p380 = pneg %p132
        %p381 = pneg %p129
        %p382 = pneg %p153
        %p383 = pneg %p150
        %s384 = sand.u32 %s27, 1
        %s385 = scalar_lea.sflag [#allocation3], %s384
        %s386 = sand.u32 %s166, 1
        %s387 = scalar_lea.vmem [#allocation13], %s386
        %p388 = pneg %p179
        %p389 = pneg %p176
        %p390 = pneg %p205
        %p391 = pneg %p202
        %s392 = sand.u32 %s192, 1
        %s393 = scalar_lea.sflag [#allocation4], %s392
        %s394 = sand.u32 %s192, 1
        %s395 = smul.addr %s394, 16
        %s396 = scalar_lea.vmem [#allocation14], %s395
        %v397 = vld [vmem:[%s334] sm:$0xff]
        %v398 = vld [vmem:[%s334 + $0x8] sm:$0xff]
        %v399 = vld [vmem:[#allocation5] sm:$0xff]
        %v400 = vld [vmem:[#allocation5 + $0x8] sm:$0xff]
        %v401 = vld [vmem:[#allocation5 + $0x10] sm:$0xff]
        %v402 = vld [vmem:[#allocation5 + $0x18] sm:$0xff]
        %v403 = vld [vmem:[#allocation5 + $0x20] sm:$0xff]
        %v404 = vld [vmem:[#allocation5 + $0x28] sm:$0xff]
        %v405 = vld [vmem:[#allocation5 + $0x30] sm:$0xff]
        %v406 = vld [vmem:[#allocation5 + $0x38] sm:$0xff]
        %v407 = vld [vmem:[#allocation5 + $0x40] sm:$0xff]
        %v408 = vld [vmem:[#allocation5 + $0x48] sm:$0xff]
        %v409 = vld [vmem:[#allocation5 + $0x50] sm:$0xff]
        %v410 = vld [vmem:[#allocation5 + $0x58] sm:$0xff]
        %v411 = vld [vmem:[#allocation5 + $0x60] sm:$0xff]
        %v412 = vld [vmem:[#allocation5 + $0x68] sm:$0xff]
        %v413 = vld [vmem:[#allocation5 + $0x70] sm:$0xff]
        %v414 = vld [vmem:[#allocation5 + $0x78] sm:$0xff]
        %v415 = vld [vmem:[#allocation7] sm:$0x3]
        %v417 = vlaneseq
        %v418 = vshrl.u32 %v417, 7
        %v419 = vsub.s32 0, %v418
        %v420 = vrot.slane %v415, %v419
        %v421 = vlaneseq
        %v422 = vshrl.u32 %v421, 7
        %v423 = vsub.s32 1, %v422
        %v424 = vrot.slane %v415, %v423
        %vm427 = vcmask 523264
        %v429 = vsel %vm427, %v397, 0
        %v432 = vsel %vm427, %v398, 0
        %434 = vmatprep.subr.mxu0 %v400
        %435 = vmatpush1.msra.mxu0 %v399
        %436 = vmatprep.subr.mxu0 %v402
        %437 = vmatpush1.msra.mxu0 %v401
        %438 = vmatprep.subr.mxu0 %v404
        %439 = vmatpush1.msra.mxu0 %v403
        %440 = vmatprep.subr.mxu0 %v406
        %441 = vmatpush1.msra.mxu0 %v405
        %442 = vmatprep.subr.mxu0 %v408
        %443 = vmatpush1.msra.mxu0 %v407
        %444 = vmatprep.subr.mxu0 %v410
        %445 = vmatpush1.msra.mxu0 %v409
        %446 = vmatprep.subr.mxu0 %v412
        %447 = vmatpush1.msra.mxu0 %v411
        %448 = vmatprep.subr.mxu0 %v414
        %449 = vmatpush1.msra.mxu0 %v413
        %450 = vmatprep.subr.mxu0 0.0
        %451 = vmatpush1.msra.mxu0 0.0
        %452 = vmatprep.subr.mxu0 0.0
        %453 = vmatpush1.msra.mxu0 0.0
        %454 = vmatprep.subr.mxu0 0.0
        %455 = vmatpush1.msra.mxu0 0.0
        %456 = vmatprep.subr.mxu0 0.0
        %457 = vmatpush1.msra.mxu0 0.0
        %458 = vmatprep.subr.mxu0 0.0
        %459 = vmatpush1.msra.mxu0 0.0
        %460 = vmatprep.subr.mxu0 0.0
        %461 = vmatpush1.msra.mxu0 0.0
        %462 = vmatprep.subr.mxu0 0.0
        %463 = vmatpush1.msra.mxu0 0.0
        %464 = vmatprep.subr.mxu0 0.0
        %465 = vmatpush1.msra.mxu0 0.0
        %466 = vmatprep.subr.mxu0 0.0
        %467 = vmatpush1.msra.mxu0 0.0
        %468 = vmatprep.subr.mxu0 0.0
        %469 = vmatpush1.msra.mxu0 0.0
        %470 = vmatprep.subr.mxu0 0.0
        %471 = vmatpush1.msra.mxu0 0.0
        %472 = vmatprep.subr.mxu0 0.0
        %473 = vmatpush1.msra.mxu0 0.0
        %474 = vmatprep.subr.mxu0 0.0
        %475 = vmatpush1.msra.mxu0 0.0
        %476 = vmatprep.subr.mxu0 0.0
        %477 = vmatpush1.msra.mxu0 0.0
        %478 = vmatprep.subr.mxu0 0.0
        %479 = vmatpush1.msra.mxu0 0.0
        %480 = vmatprep.subr.mxu0 0.0
        %481 = vmatpush1.msra.mxu0 0.0
        %482 = vmatprep.subr.mxu0 0.0
        %483 = vmatpush1.msra.mxu0 0.0
        %484 = vmatprep.subr.mxu0 0.0
        %485 = vmatpush1.msra.mxu0 0.0
        %486 = vmatprep.subr.mxu0 0.0
        %487 = vmatpush1.msra.mxu0 0.0
        %488 = vmatprep.subr.mxu0 0.0
        %489 = vmatpush1.msra.mxu0 0.0
        %490 = vmatprep.subr.mxu0 0.0
        %491 = vmatpush1.msra.mxu0 0.0
        %492 = vmatprep.subr.mxu0 0.0
        %493 = vmatpush1.msra.mxu0 0.0
        %494 = vmatprep.subr.mxu0 0.0
        %495 = vmatpush1.msra.mxu0 0.0
        %496 = vmatprep.subr.mxu0 0.0
        %497 = vmatpush1.msra.mxu0 0.0
        %498 = vmatprep.mubr.f32.mxu0 0.0
        %499 = vmatmul.mubr.f32.gmra.mrb[0].mxu0 %v429
        %v500 = vpop.f32.mrb[0].mxu0
        %v501 = vadd.f32 %v420, %v500
        %v502 = vpop.f32.mrb[0].mxu0
        %v503 = vadd.f32 %v424, %v502
        %504 = vmatprep.mubr.f32.mxu0 0.0
        %505 = vmatmul.mubr.f32.gmra.mrb[0].mxu0 %v432
        %v506 = vpop.f32.mrb[0].mxu0
        %v507 = vadd.f32 %v420, %v506
        %v508 = vpop.f32.mrb[0].mxu0
        %v509 = vadd.f32 %v424, %v508
        %510 = vdwg.mxu0
        %v511 = vld [vmem:[#allocation11] sm:$0xff]
        %v512 = vld [vmem:[#allocation11 + $0x8] sm:$0xff]
        %vm513 = vcmp.ne.f32.partialorder %v511, 0.0
        %vm514 = vcmp.ne.f32.partialorder %v512, 0.0
        %v515 = vld [vmem:[%s362] sm:$0x1]
        %vm516 = vcmp.ne.f32.partialorder %v515, 0.0
        %v517 = vsel %vm516, 1, 0
        %v518 = vlaneseq
        %v519 = vshrl.u32 %v518, 7
        %v520 = vsub.s32 0, %v519
        %v521 = vrot.slane %v517, %v520
        %vm522 = vcmp.eq.s32.totalorder %v521, 1
        %vm523 = vmand %vm513, %vm522
        %vm524 = vmand %vm514, %vm522
        %527 = vrot.lane.b32.xlu0 %v501, 64
        %v528 = vpop.permute.xlu0 %527
        %529 = vrot.lane.b32.xlu0 %v507, 64
        %v530 = vpop.permute.xlu0 %529
        %vm531 = vcmask 130048
        %v532 = vsel %vm531, %v501, 0
        %v534 = vsel %vm531, %v507, 0
        %v536 = vsel %vm531, %v528, 0
        %v538 = vsel %vm531, %v530, 0
        %540 = vmatprep.subr.mxu0 0.0
        %541 = vmatpush1.xpose.msra.mxu0 %v536
        %542 = vmatprep.subr.mxu0 0.0
        %543 = vmatpush1.xpose.msra.mxu0 %v538
        %544 = vmatprep.subr.mxu0 0.0
        %545 = vmatpush1.xpose.msra.mxu0 0.0
        %546 = vmatprep.subr.mxu0 0.0
        %547 = vmatpush1.xpose.msra.mxu0 0.0
        %548 = vmatprep.subr.mxu0 0.0
        %549 = vmatpush1.xpose.msra.mxu0 0.0
        %550 = vmatprep.subr.mxu0 0.0
        %551 = vmatpush1.xpose.msra.mxu0 0.0
        %552 = vmatprep.subr.mxu0 0.0
        %553 = vmatpush1.xpose.msra.mxu0 0.0
        %554 = vmatprep.subr.mxu0 0.0
        %555 = vmatpush1.xpose.msra.mxu0 0.0
        %556 = vmatprep.subr.mxu0 0.0
        %557 = vmatpush1.xpose.msra.mxu0 0.0
        %558 = vmatprep.subr.mxu0 0.0
        %559 = vmatpush1.xpose.msra.mxu0 0.0
        %560 = vmatprep.subr.mxu0 0.0
        %561 = vmatpush1.xpose.msra.mxu0 0.0
        %562 = vmatprep.subr.mxu0 0.0
        %563 = vmatpush1.xpose.msra.mxu0 0.0
        %564 = vmatprep.subr.mxu0 0.0
        %565 = vmatpush1.xpose.msra.mxu0 0.0
        %566 = vmatprep.subr.mxu0 0.0
        %567 = vmatpush1.xpose.msra.mxu0 0.0
        %568 = vmatprep.subr.mxu0 0.0
        %569 = vmatpush1.xpose.msra.mxu0 0.0
        %570 = vmatprep.subr.mxu0 0.0
        %571 = vmatpush1.xpose.msra.mxu0 0.0
        %572 = vmatprep.subr.mxu0 0.0
        %573 = vmatpush1.xpose.msra.mxu0 0.0
        %574 = vmatprep.subr.mxu0 0.0
        %575 = vmatpush1.xpose.msra.mxu0 0.0
        %576 = vmatprep.subr.mxu0 0.0
        %577 = vmatpush1.xpose.msra.mxu0 0.0
        %578 = vmatprep.subr.mxu0 0.0
        %579 = vmatpush1.xpose.msra.mxu0 0.0
        %580 = vmatprep.subr.mxu0 0.0
        %581 = vmatpush1.xpose.msra.mxu0 0.0
        %582 = vmatprep.subr.mxu0 0.0
        %583 = vmatpush1.xpose.msra.mxu0 0.0
        %584 = vmatprep.subr.mxu0 0.0
        %585 = vmatpush1.xpose.msra.mxu0 0.0
        %586 = vmatprep.subr.mxu0 0.0
        %587 = vmatpush1.xpose.msra.mxu0 0.0
        %588 = vmatprep.subr.mxu0 0.0
        %589 = vmatpush1.xpose.msra.mxu0 0.0
        %590 = vmatprep.subr.mxu0 0.0
        %591 = vmatpush1.xpose.msra.mxu0 0.0
        %592 = vmatprep.subr.mxu0 0.0
        %593 = vmatpush1.xpose.msra.mxu0 0.0
        %594 = vmatprep.subr.mxu0 0.0
        %595 = vmatpush1.xpose.msra.mxu0 0.0
        %596 = vmatprep.subr.mxu0 0.0
        %597 = vmatpush1.xpose.msra.mxu0 0.0
        %598 = vmatprep.subr.mxu0 0.0
        %599 = vmatpush1.xpose.msra.mxu0 0.0
        %600 = vmatprep.subr.mxu0 0.0
        %601 = vmatpush1.xpose.msra.mxu0 0.0
        %602 = vmatprep.subr.mxu0 0.0
        %603 = vmatpush1.xpose.msra.mxu0 0.0
        %604 = vmatprep.mubr.f32.mxu0 0.0
        %605 = vmatmul.mubr.f32.gmra.mrb[0].mxu0 %v532
        %v606 = vpop.f32.mrb[0].mxu0
        %v607 = vadd.f32 0.0, %v606
        %v608 = vpop.f32.mrb[0].mxu0
        %609 = vmatprep.mubr.f32.mxu0 0.0
        %610 = vmatmul.mubr.f32.gmra.mrb[0].mxu0 %v534
        %v611 = vpop.f32.mrb[0].mxu0
        %v612 = vadd.f32 0.0, %v611
        %v613 = vpop.f32.mrb[0].mxu0
        %614 = vdwg.mxu0
        %v615 = vsel %vm523, %v607, -1e+09
        %v616 = vsel %vm524, %v612, -1e+09
        %v617 = vsel %vm531, %v615, -inf
        %618 = vmax.xlane.f32.xlu0 %v617
        %v619 = vpop.xlane.xlu0 %618
        %v620 = vsel %vm531, %v616, -inf
        %621 = vmax.xlane.f32.xlu0 %v620
        %v622 = vpop.xlane.xlu0 %621
        %v623 = vsub.f32 %v615, %v619
        %v624 = vsub.f32 %v616, %v622
        %v625 = vmul.f32 %v623, 1.442695
        %v626 = vpow.pop %v625
        %v627 = vmul.f32 %v624, 1.442695
        %v628 = vpow.pop %v627
        %v629 = vsel %vm531, %v626, 0.0
        %630 = vadd.xlane.f32.xlu0 %v629
        %v631 = vpop.xlane.xlu0 %630
        %v632 = vsel %vm531, %v628, 0.0
        %633 = vadd.xlane.f32.xlu0 %v632
        %v634 = vpop.xlane.xlu0 %633
        %v636 = vsel %vm531, %v626, 0
        %v639 = vsel %vm531, %v628, 0
        %641 = vmatprep.subr.mxu0 0.0
        %642 = vmatpush1.msra.mxu0 %v503
        %643 = vmatprep.subr.mxu0 0.0
        %644 = vmatpush1.msra.mxu0 %v509
        %645 = vmatprep.subr.mxu0 0.0
        %646 = vmatpush1.msra.mxu0 0.0
        %647 = vmatprep.subr.mxu0 0.0
        %648 = vmatpush1.msra.mxu0 0.0
        %649 = vmatprep.subr.mxu0 0.0
        %650 = vmatpush1.msra.mxu0 0.0
        %651 = vmatprep.subr.mxu0 0.0
        %652 = vmatpush1.msra.mxu0 0.0
        %653 = vmatprep.subr.mxu0 0.0
        %654 = vmatpush1.msra.mxu0 0.0
        %655 = vmatprep.subr.mxu0 0.0
        %656 = vmatpush1.msra.mxu0 0.0
        %657 = vmatprep.subr.mxu0 0.0
        %658 = vmatpush1.msra.mxu0 0.0
        %659 = vmatprep.subr.mxu0 0.0
        %660 = vmatpush1.msra.mxu0 0.0
        %661 = vmatprep.subr.mxu0 0.0
        %662 = vmatpush1.msra.mxu0 0.0
        %663 = vmatprep.subr.mxu0 0.0
        %664 = vmatpush1.msra.mxu0 0.0
        %665 = vmatprep.subr.mxu0 0.0
        %666 = vmatpush1.msra.mxu0 0.0
        %667 = vmatprep.subr.mxu0 0.0
        %668 = vmatpush1.msra.mxu0 0.0
        %669 = vmatprep.subr.mxu0 0.0
        %670 = vmatpush1.msra.mxu0 0.0
        %671 = vmatprep.subr.mxu0 0.0
        %672 = vmatpush1.msra.mxu0 0.0
        %673 = vmatprep.subr.mxu0 0.0
        %674 = vmatpush1.msra.mxu0 0.0
        %675 = vmatprep.subr.mxu0 0.0
        %676 = vmatpush1.msra.mxu0 0.0
        %677 = vmatprep.subr.mxu0 0.0
        %678 = vmatpush1.msra.mxu0 0.0
        %679 = vmatprep.subr.mxu0 0.0
        %680 = vmatpush1.msra.mxu0 0.0
        %681 = vmatprep.subr.mxu0 0.0
        %682 = vmatpush1.msra.mxu0 0.0
        %683 = vmatprep.subr.mxu0 0.0
        %684 = vmatpush1.msra.mxu0 0.0
        %685 = vmatprep.subr.mxu0 0.0
        %686 = vmatpush1.msra.mxu0 0.0
        %687 = vmatprep.subr.mxu0 0.0
        %688 = vmatpush1.msra.mxu0 0.0
        %689 = vmatprep.subr.mxu0 0.0
        %690 = vmatpush1.msra.mxu0 0.0
        %691 = vmatprep.subr.mxu0 0.0
        %692 = vmatpush1.msra.mxu0 0.0
        %693 = vmatprep.subr.mxu0 0.0
        %694 = vmatpush1.msra.mxu0 0.0
        %695 = vmatprep.subr.mxu0 0.0
        %696 = vmatpush1.msra.mxu0 0.0
        %697 = vmatprep.subr.mxu0 0.0
        %698 = vmatpush1.msra.mxu0 0.0
        %699 = vmatprep.subr.mxu0 0.0
        %700 = vmatpush1.msra.mxu0 0.0
        %701 = vmatprep.subr.mxu0 0.0
        %702 = vmatpush1.msra.mxu0 0.0
        %703 = vmatprep.subr.mxu0 0.0
        %704 = vmatpush1.msra.mxu0 0.0
        %705 = vmatprep.mubr.f32.mxu0 0.0
        %706 = vmatmul.mubr.f32.gmra.mrb[0].mxu0 %v636
        %v707 = vpop.f32.mrb[0].mxu0
        %v708 = vadd.f32 0.0, %v707
        %v709 = vpop.f32.mrb[0].mxu0
        %710 = vmatprep.mubr.f32.mxu0 0.0
        %711 = vmatmul.mubr.f32.gmra.mrb[0].mxu0 %v639
        %v712 = vpop.f32.mrb[0].mxu0
        %v713 = vadd.f32 0.0, %v712
        %v714 = vpop.f32.mrb[0].mxu0
        %715 = vdwg.mxu0
        %v716 = vrcp.pop %v631
        %v717 = vmul.f32 1.0, %v716
        %v718 = vrcp.pop %v634
        %v719 = vmul.f32 1.0, %v718
        %v720 = vmul.f32 %v708, %v717
        %v721 = vmul.f32 %v713, %v719
        %722 = vrot.lane.b32.xlu0 %v501, 112
        %v723 = vpop.permute.xlu0 %722
        %724 = vrot.lane.b32.xlu0 %v507, 112
        %v725 = vpop.permute.xlu0 %724
        %726 = vrot.lane.b32.xlu0 %v501, 48
        %v727 = vpop.permute.xlu0 %726
        %728 = vrot.lane.b32.xlu0 %v507, 48
        %v729 = vpop.permute.xlu0 %728
        %v730 = vsel %vm531, %v723, 0
        %v732 = vsel %vm531, %v725, 0
        %v734 = vsel %vm531, %v727, 0
        %v736 = vsel %vm531, %v729, 0
        %738 = vmatprep.subr.mxu0 0.0
        %739 = vmatpush1.xpose.msra.mxu0 %v734
        %740 = vmatprep.subr.mxu0 0.0
        %741 = vmatpush1.xpose.msra.mxu0 %v736
        %742 = vmatprep.subr.mxu0 0.0
        %743 = vmatpush1.xpose.msra.mxu0 0.0
        %744 = vmatprep.subr.mxu0 0.0
        %745 = vmatpush1.xpose.msra.mxu0 0.0
        %746 = vmatprep.subr.mxu0 0.0
        %747 = vmatpush1.xpose.msra.mxu0 0.0
        %748 = vmatprep.subr.mxu0 0.0
        %749 = vmatpush1.xpose.msra.mxu0 0.0
        %750 = vmatprep.subr.mxu0 0.0
        %751 = vmatpush1.xpose.msra.mxu0 0.0
        %752 = vmatprep.subr.mxu0 0.0
        %753 = vmatpush1.xpose.msra.mxu0 0.0
        %754 = vmatprep.subr.mxu0 0.0
        %755 = vmatpush1.xpose.msra.mxu0 0.0
        %756 = vmatprep.subr.mxu0 0.0
        %757 = vmatpush1.xpose.msra.mxu0 0.0
        %758 = vmatprep.subr.mxu0 0.0
        %759 = vmatpush1.xpose.msra.mxu0 0.0
        %760 = vmatprep.subr.mxu0 0.0
        %761 = vmatpush1.xpose.msra.mxu0 0.0
        %762 = vmatprep.subr.mxu0 0.0
        %763 = vmatpush1.xpose.msra.mxu0 0.0
        %764 = vmatprep.subr.mxu0 0.0
        %765 = vmatpush1.xpose.msra.mxu0 0.0
        %766 = vmatprep.subr.mxu0 0.0
        %767 = vmatpush1.xpose.msra.mxu0 0.0
        %768 = vmatprep.subr.mxu0 0.0
        %769 = vmatpush1.xpose.msra.mxu0 0.0
        %770 = vmatprep.subr.mxu0 0.0
        %771 = vmatpush1.xpose.msra.mxu0 0.0
        %772 = vmatprep.subr.mxu0 0.0
        %773 = vmatpush1.xpose.msra.mxu0 0.0
        %774 = vmatprep.subr.mxu0 0.0
        %775 = vmatpush1.xpose.msra.mxu0 0.0
        %776 = vmatprep.subr.mxu0 0.0
        %777 = vmatpush1.xpose.msra.mxu0 0.0
        %778 = vmatprep.subr.mxu0 0.0
        %779 = vmatpush1.xpose.msra.mxu0 0.0
        %780 = vmatprep.subr.mxu0 0.0
        %781 = vmatpush1.xpose.msra.mxu0 0.0
        %782 = vmatprep.subr.mxu0 0.0
        %783 = vmatpush1.xpose.msra.mxu0 0.0
        %784 = vmatprep.subr.mxu0 0.0
        %785 = vmatpush1.xpose.msra.mxu0 0.0
        %786 = vmatprep.subr.mxu0 0.0
        %787 = vmatpush1.xpose.msra.mxu0 0.0
        %788 = vmatprep.subr.mxu0 0.0
        %789 = vmatpush1.xpose.msra.mxu0 0.0
        %790 = vmatprep.subr.mxu0 0.0
        %791 = vmatpush1.xpose.msra.mxu0 0.0
        %792 = vmatprep.subr.mxu0 0.0
        %793 = vmatpush1.xpose.msra.mxu0 0.0
        %794 = vmatprep.subr.mxu0 0.0
        %795 = vmatpush1.xpose.msra.mxu0 0.0
        %796 = vmatprep.subr.mxu0 0.0
        %797 = vmatpush1.xpose.msra.mxu0 0.0
        %798 = vmatprep.subr.mxu0 0.0
        %799 = vmatpush1.xpose.msra.mxu0 0.0
        %800 = vmatprep.subr.mxu0 0.0
        %801 = vmatpush1.xpose.msra.mxu0 0.0
        %802 = vmatprep.mubr.f32.mxu0 0.0
        %803 = vmatmul.mubr.f32.gmra.mrb[0].mxu0 %v730
        %v804 = vpop.f32.mrb[0].mxu0
        %v805 = vadd.f32 0.0, %v804
        %v806 = vpop.f32.mrb[0].mxu0
        %807 = vmatprep.mubr.f32.mxu0 0.0
        %808 = vmatmul.mubr.f32.gmra.mrb[0].mxu0 %v732
        %v809 = vpop.f32.mrb[0].mxu0
        %v810 = vadd.f32 0.0, %v809
        %v811 = vpop.f32.mrb[0].mxu0
        %812 = vdwg.mxu0
        %v813 = vsel %vm523, %v805, -1e+09
        %v814 = vsel %vm524, %v810, -1e+09
        %v815 = vsel %vm531, %v813, -inf
        %816 = vmax.xlane.f32.xlu0 %v815
        %v817 = vpop.xlane.xlu0 %816
        %v818 = vsel %vm531, %v814, -inf
        %819 = vmax.xlane.f32.xlu0 %v818
        %v820 = vpop.xlane.xlu0 %819
        %v821 = vsub.f32 %v813, %v817
        %v822 = vsub.f32 %v814, %v820
        %v823 = vmul.f32 %v821, 1.442695
        %v824 = vpow.pop %v823
        %v825 = vmul.f32 %v822, 1.442695
        %v826 = vpow.pop %v825
        %v827 = vsel %vm531, %v824, 0.0
        %828 = vadd.xlane.f32.xlu0 %v827
        %v829 = vpop.xlane.xlu0 %828
        %v830 = vsel %vm531, %v826, 0.0
        %831 = vadd.xlane.f32.xlu0 %v830
        %v832 = vpop.xlane.xlu0 %831
        %835 = vrot.lane.b32.xlu0 %v503, 112
        %v836 = vpop.permute.xlu0 %835
        %837 = vrot.lane.b32.xlu0 %v509, 112
        %v838 = vpop.permute.xlu0 %837
        %v842 = vsel %vm531, %v824, 0
        %v845 = vsel %vm531, %v826, 0
        %847 = vmatprep.subr.mxu0 0.0
        %848 = vmatpush1.msra.mxu0 %v836
        %849 = vmatprep.subr.mxu0 0.0
        %850 = vmatpush1.msra.mxu0 %v838
        %851 = vmatprep.subr.mxu0 0.0
        %852 = vmatpush1.msra.mxu0 0.0
        %853 = vmatprep.subr.mxu0 0.0
        %854 = vmatpush1.msra.mxu0 0.0
        %855 = vmatprep.subr.mxu0 0.0
        %856 = vmatpush1.msra.mxu0 0.0
        %857 = vmatprep.subr.mxu0 0.0
        %858 = vmatpush1.msra.mxu0 0.0
        %859 = vmatprep.subr.mxu0 0.0
        %860 = vmatpush1.msra.mxu0 0.0
        %861 = vmatprep.subr.mxu0 0.0
        %862 = vmatpush1.msra.mxu0 0.0
        %863 = vmatprep.subr.mxu0 0.0
        %864 = vmatpush1.msra.mxu0 0.0
        %865 = vmatprep.subr.mxu0 0.0
        %866 = vmatpush1.msra.mxu0 0.0
        %867 = vmatprep.subr.mxu0 0.0
        %868 = vmatpush1.msra.mxu0 0.0
        %869 = vmatprep.subr.mxu0 0.0
        %870 = vmatpush1.msra.mxu0 0.0
        %871 = vmatprep.subr.mxu0 0.0
        %872 = vmatpush1.msra.mxu0 0.0
        %873 = vmatprep.subr.mxu0 0.0
        %874 = vmatpush1.msra.mxu0 0.0
        %875 = vmatprep.subr.mxu0 0.0
        %876 = vmatpush1.msra.mxu0 0.0
        %877 = vmatprep.subr.mxu0 0.0
        %878 = vmatpush1.msra.mxu0 0.0
        %879 = vmatprep.subr.mxu0 0.0
        %880 = vmatpush1.msra.mxu0 0.0
        %881 = vmatprep.subr.mxu0 0.0
        %882 = vmatpush1.msra.mxu0 0.0
        %883 = vmatprep.subr.mxu0 0.0
        %884 = vmatpush1.msra.mxu0 0.0
        %885 = vmatprep.subr.mxu0 0.0
        %886 = vmatpush1.msra.mxu0 0.0
        %887 = vmatprep.subr.mxu0 0.0
        %888 = vmatpush1.msra.mxu0 0.0
        %889 = vmatprep.subr.mxu0 0.0
        %890 = vmatpush1.msra.mxu0 0.0
        %891 = vmatprep.subr.mxu0 0.0
        %892 = vmatpush1.msra.mxu0 0.0
        %893 = vmatprep.subr.mxu0 0.0
        %894 = vmatpush1.msra.mxu0 0.0
        %895 = vmatprep.subr.mxu0 0.0
        %896 = vmatpush1.msra.mxu0 0.0
        %897 = vmatprep.subr.mxu0 0.0
        %898 = vmatpush1.msra.mxu0 0.0
        %899 = vmatprep.subr.mxu0 0.0
        %900 = vmatpush1.msra.mxu0 0.0
        %901 = vmatprep.subr.mxu0 0.0
        %902 = vmatpush1.msra.mxu0 0.0
        %903 = vmatprep.subr.mxu0 0.0
        %904 = vmatpush1.msra.mxu0 0.0
        %905 = vmatprep.subr.mxu0 0.0
        %906 = vmatpush1.msra.mxu0 0.0
        %907 = vmatprep.subr.mxu0 0.0
        %908 = vmatpush1.msra.mxu0 0.0
        %909 = vmatprep.subr.mxu0 0.0
        %910 = vmatpush1.msra.mxu0 0.0
        %911 = vmatprep.mubr.f32.mxu0 0.0
        %912 = vmatmul.mubr.f32.gmra.mrb[0].mxu0 %v842
        %v913 = vpop.f32.mrb[0].mxu0
        %v914 = vadd.f32 0.0, %v913
        %v915 = vpop.f32.mrb[0].mxu0
        %916 = vmatprep.mubr.f32.mxu0 0.0
        %917 = vmatmul.mubr.f32.gmra.mrb[0].mxu0 %v845
        %v918 = vpop.f32.mrb[0].mxu0
        %v919 = vadd.f32 0.0, %v918
        %v920 = vpop.f32.mrb[0].mxu0
        %921 = vdwg.mxu0
        %v922 = vrcp.pop %v829
        %v923 = vmul.f32 1.0, %v922
        %v924 = vrcp.pop %v832
        %v925 = vmul.f32 1.0, %v924
        %v926 = vmul.f32 %v914, %v923
        %v927 = vmul.f32 %v919, %v925
        %928 = vrot.lane.b32.xlu0 %v501, 96
        %v929 = vpop.permute.xlu0 %928
        %930 = vrot.lane.b32.xlu0 %v507, 96
        %v931 = vpop.permute.xlu0 %930
        %932 = vrot.lane.b32.xlu0 %v501, 32
        %v933 = vpop.permute.xlu0 %932
        %934 = vrot.lane.b32.xlu0 %v507, 32
        %v935 = vpop.permute.xlu0 %934
        %v936 = vsel %vm531, %v929, 0
        %v938 = vsel %vm531, %v931, 0
        %v940 = vsel %vm531, %v933, 0
        %v942 = vsel %vm531, %v935, 0
        %944 = vmatprep.subr.mxu0 0.0
        %945 = vmatpush1.xpose.msra.mxu0 %v940
        %946 = vmatprep.subr.mxu0 0.0
        %947 = vmatpush1.xpose.msra.mxu0 %v942
        %948 = vmatprep.subr.mxu0 0.0
        %949 = vmatpush1.xpose.msra.mxu0 0.0
        %950 = vmatprep.subr.mxu0 0.0
        %951 = vmatpush1.xpose.msra.mxu0 0.0
        %952 = vmatprep.subr.mxu0 0.0
        %953 = vmatpush1.xpose.msra.mxu0 0.0
        %954 = vmatprep.subr.mxu0 0.0
        %955 = vmatpush1.xpose.msra.mxu0 0.0
        %956 = vmatprep.subr.mxu0 0.0
        %957 = vmatpush1.xpose.msra.mxu0 0.0
        %958 = vmatprep.subr.mxu0 0.0
        %959 = vmatpush1.xpose.msra.mxu0 0.0
        %960 = vmatprep.subr.mxu0 0.0
        %961 = vmatpush1.xpose.msra.mxu0 0.0
        %962 = vmatprep.subr.mxu0 0.0
        %963 = vmatpush1.xpose.msra.mxu0 0.0
        %964 = vmatprep.subr.mxu0 0.0
        %965 = vmatpush1.xpose.msra.mxu0 0.0
        %966 = vmatprep.subr.mxu0 0.0
        %967 = vmatpush1.xpose.msra.mxu0 0.0
        %968 = vmatprep.subr.mxu0 0.0
        %969 = vmatpush1.xpose.msra.mxu0 0.0
        %970 = vmatprep.subr.mxu0 0.0
        %971 = vmatpush1.xpose.msra.mxu0 0.0
        %972 = vmatprep.subr.mxu0 0.0
        %973 = vmatpush1.xpose.msra.mxu0 0.0
        %974 = vmatprep.subr.mxu0 0.0
        %975 = vmatpush1.xpose.msra.mxu0 0.0
        %976 = vmatprep.subr.mxu0 0.0
        %977 = vmatpush1.xpose.msra.mxu0 0.0
        %978 = vmatprep.subr.mxu0 0.0
        %979 = vmatpush1.xpose.msra.mxu0 0.0
        %980 = vmatprep.subr.mxu0 0.0
        %981 = vmatpush1.xpose.msra.mxu0 0.0
        %982 = vmatprep.subr.mxu0 0.0
        %983 = vmatpush1.xpose.msra.mxu0 0.0
        %984 = vmatprep.subr.mxu0 0.0
        %985 = vmatpush1.xpose.msra.mxu0 0.0
        %986 = vmatprep.subr.mxu0 0.0
        %987 = vmatpush1.xpose.msra.mxu0 0.0
        %988 = vmatprep.subr.mxu0 0.0
        %989 = vmatpush1.xpose.msra.mxu0 0.0
        %990 = vmatprep.subr.mxu0 0.0
        %991 = vmatpush1.xpose.msra.mxu0 0.0
        %992 = vmatprep.subr.mxu0 0.0
        %993 = vmatpush1.xpose.msra.mxu0 0.0
        %994 = vmatprep.subr.mxu0 0.0
        %995 = vmatpush1.xpose.msra.mxu0 0.0
        %996 = vmatprep.subr.mxu0 0.0
        %997 = vmatpush1.xpose.msra.mxu0 0.0
        %998 = vmatprep.subr.mxu0 0.0
        %999 = vmatpush1.xpose.msra.mxu0 0.0
        %1000 = vmatprep.subr.mxu0 0.0
        %1001 = vmatpush1.xpose.msra.mxu0 0.0
        %1002 = vmatprep.subr.mxu0 0.0
        %1003 = vmatpush1.xpose.msra.mxu0 0.0
        %1004 = vmatprep.subr.mxu0 0.0
        %1005 = vmatpush1.xpose.msra.mxu0 0.0
        %1006 = vmatprep.subr.mxu0 0.0
        %1007 = vmatpush1.xpose.msra.mxu0 0.0
        %1008 = vmatprep.mubr.f32.mxu0 0.0
        %1009 = vmatmul.mubr.f32.gmra.mrb[0].mxu0 %v936
        %v1010 = vpop.f32.mrb[0].mxu0
        %v1011 = vadd.f32 0.0, %v1010
        %v1012 = vpop.f32.mrb[0].mxu0
        %1013 = vmatprep.mubr.f32.mxu0 0.0
        %1014 = vmatmul.mubr.f32.gmra.mrb[0].mxu0 %v938
        %v1015 = vpop.f32.mrb[0].mxu0
        %v1016 = vadd.f32 0.0, %v1015
        %v1017 = vpop.f32.mrb[0].mxu0
        %1018 = vdwg.mxu0
        %v1019 = vsel %vm523, %v1011, -1e+09
        %v1020 = vsel %vm524, %v1016, -1e+09
        %v1021 = vsel %vm531, %v1019, -inf
        %1022 = vmax.xlane.f32.xlu0 %v1021
        %v1023 = vpop.xlane.xlu0 %1022
        %v1024 = vsel %vm531, %v1020, -inf
        %1025 = vmax.xlane.f32.xlu0 %v1024
        %v1026 = vpop.xlane.xlu0 %1025
        %v1027 = vsub.f32 %v1019, %v1023
        %v1028 = vsub.f32 %v1020, %v1026
        %v1029 = vmul.f32 %v1027, 1.442695
        %v1030 = vpow.pop %v1029
        %v1031 = vmul.f32 %v1028, 1.442695
        %v1032 = vpow.pop %v1031
        %v1033 = vsel %vm531, %v1030, 0.0
        %1034 = vadd.xlane.f32.xlu0 %v1033
        %v1035 = vpop.xlane.xlu0 %1034
        %v1036 = vsel %vm531, %v1032, 0.0
        %1037 = vadd.xlane.f32.xlu0 %v1036
        %v1038 = vpop.xlane.xlu0 %1037
        %1039 = vrot.lane.b32.xlu0 %v503, 96
        %v1040 = vpop.permute.xlu0 %1039
        %1041 = vrot.lane.b32.xlu0 %v509, 96
        %v1042 = vpop.permute.xlu0 %1041
        %v1046 = vsel %vm531, %v1030, 0
        %v1049 = vsel %vm531, %v1032, 0
        %1051 = vmatprep.subr.mxu0 0.0
        %1052 = vmatpush1.msra.mxu0 %v1040
        %1053 = vmatprep.subr.mxu0 0.0
        %1054 = vmatpush1.msra.mxu0 %v1042
        %1055 = vmatprep.subr.mxu0 0.0
        %1056 = vmatpush1.msra.mxu0 0.0
        %1057 = vmatprep.subr.mxu0 0.0
        %1058 = vmatpush1.msra.mxu0 0.0
        %1059 = vmatprep.subr.mxu0 0.0
        %1060 = vmatpush1.msra.mxu0 0.0
        %1061 = vmatprep.subr.mxu0 0.0
        %1062 = vmatpush1.msra.mxu0 0.0
        %1063 = vmatprep.subr.mxu0 0.0
        %1064 = vmatpush1.msra.mxu0 0.0
        %1065 = vmatprep.subr.mxu0 0.0
        %1066 = vmatpush1.msra.mxu0 0.0
        %1067 = vmatprep.subr.mxu0 0.0
        %1068 = vmatpush1.msra.mxu0 0.0
        %1069 = vmatprep.subr.mxu0 0.0
        %1070 = vmatpush1.msra.mxu0 0.0
        %1071 = vmatprep.subr.mxu0 0.0
        %1072 = vmatpush1.msra.mxu0 0.0
        %1073 = vmatprep.subr.mxu0 0.0
        %1074 = vmatpush1.msra.mxu0 0.0
        %1075 = vmatprep.subr.mxu0 0.0
        %1076 = vmatpush1.msra.mxu0 0.0
        %1077 = vmatprep.subr.mxu0 0.0
        %1078 = vmatpush1.msra.mxu0 0.0
        %1079 = vmatprep.subr.mxu0 0.0
        %1080 = vmatpush1.msra.mxu0 0.0
        %1081 = vmatprep.subr.mxu0 0.0
        %1082 = vmatpush1.msra.mxu0 0.0
        %1083 = vmatprep.subr.mxu0 0.0
        %1084 = vmatpush1.msra.mxu0 0.0
        %1085 = vmatprep.subr.mxu0 0.0
        %1086 = vmatpush1.msra.mxu0 0.0
        %1087 = vmatprep.subr.mxu0 0.0
        %1088 = vmatpush1.msra.mxu0 0.0
        %1089 = vmatprep.subr.mxu0 0.0
        %1090 = vmatpush1.msra.mxu0 0.0
        %1091 = vmatprep.subr.mxu0 0.0
        %1092 = vmatpush1.msra.mxu0 0.0
        %1093 = vmatprep.subr.mxu0 0.0
        %1094 = vmatpush1.msra.mxu0 0.0
        %1095 = vmatprep.subr.mxu0 0.0
        %1096 = vmatpush1.msra.mxu0 0.0
        %1097 = vmatprep.subr.mxu0 0.0
        %1098 = vmatpush1.msra.mxu0 0.0
        %1099 = vmatprep.subr.mxu0 0.0
        %1100 = vmatpush1.msra.mxu0 0.0
        %1101 = vmatprep.subr.mxu0 0.0
        %1102 = vmatpush1.msra.mxu0 0.0
        %1103 = vmatprep.subr.mxu0 0.0
        %1104 = vmatpush1.msra.mxu0 0.0
        %1105 = vmatprep.subr.mxu0 0.0
        %1106 = vmatpush1.msra.mxu0 0.0
        %1107 = vmatprep.subr.mxu0 0.0
        %1108 = vmatpush1.msra.mxu0 0.0
        %1109 = vmatprep.subr.mxu0 0.0
        %1110 = vmatpush1.msra.mxu0 0.0
        %1111 = vmatprep.subr.mxu0 0.0
        %1112 = vmatpush1.msra.mxu0 0.0
        %1113 = vmatprep.subr.mxu0 0.0
        %1114 = vmatpush1.msra.mxu0 0.0
        %1115 = vmatprep.mubr.f32.mxu0 0.0
        %1116 = vmatmul.mubr.f32.gmra.mrb[0].mxu0 %v1046
        %v1117 = vpop.f32.mrb[0].mxu0
        %v1118 = vadd.f32 0.0, %v1117
        %v1119 = vpop.f32.mrb[0].mxu0
        %1120 = vmatprep.mubr.f32.mxu0 0.0
        %1121 = vmatmul.mubr.f32.gmra.mrb[0].mxu0 %v1049
        %v1122 = vpop.f32.mrb[0].mxu0
        %v1123 = vadd.f32 0.0, %v1122
        %v1124 = vpop.f32.mrb[0].mxu0
        %1125 = vdwg.mxu0
        %v1126 = vrcp.pop %v1035
        %v1127 = vmul.f32 1.0, %v1126
        %v1128 = vrcp.pop %v1038
        %v1129 = vmul.f32 1.0, %v1128
        %v1130 = vmul.f32 %v1118, %v1127
        %v1131 = vmul.f32 %v1123, %v1129
        %1132 = vrot.lane.b32.xlu0 %v501, 80
        %v1133 = vpop.permute.xlu0 %1132
        %1134 = vrot.lane.b32.xlu0 %v507, 80
        %v1135 = vpop.permute.xlu0 %1134
        %1136 = vrot.lane.b32.xlu0 %v501, 16
        %v1137 = vpop.permute.xlu0 %1136
        %1138 = vrot.lane.b32.xlu0 %v507, 16
        %v1139 = vpop.permute.xlu0 %1138
        %v1140 = vsel %vm531, %v1133, 0
        %v1142 = vsel %vm531, %v1135, 0
        %v1144 = vsel %vm531, %v1137, 0
        %v1146 = vsel %vm531, %v1139, 0
        %1148 = vmatprep.subr.mxu0 0.0
        %1149 = vmatpush1.xpose.msra.mxu0 %v1144
        %1150 = vmatprep.subr.mxu0 0.0
        %1151 = vmatpush1.xpose.msra.mxu0 %v1146
        %1152 = vmatprep.subr.mxu0 0.0
        %1153 = vmatpush1.xpose.msra.mxu0 0.0
        %1154 = vmatprep.subr.mxu0 0.0
        %1155 = vmatpush1.xpose.msra.mxu0 0.0
        %1156 = vmatprep.subr.mxu0 0.0
        %1157 = vmatpush1.xpose.msra.mxu0 0.0
        %1158 = vmatprep.subr.mxu0 0.0
        %1159 = vmatpush1.xpose.msra.mxu0 0.0
        %1160 = vmatprep.subr.mxu0 0.0
        %1161 = vmatpush1.xpose.msra.mxu0 0.0
        %1162 = vmatprep.subr.mxu0 0.0
        %1163 = vmatpush1.xpose.msra.mxu0 0.0
        %1164 = vmatprep.subr.mxu0 0.0
        %1165 = vmatpush1.xpose.msra.mxu0 0.0
        %1166 = vmatprep.subr.mxu0 0.0
        %1167 = vmatpush1.xpose.msra.mxu0 0.0
        %1168 = vmatprep.subr.mxu0 0.0
        %1169 = vmatpush1.xpose.msra.mxu0 0.0
        %1170 = vmatprep.subr.mxu0 0.0
        %1171 = vmatpush1.xpose.msra.mxu0 0.0
        %1172 = vmatprep.subr.mxu0 0.0
        %1173 = vmatpush1.xpose.msra.mxu0 0.0
        %1174 = vmatprep.subr.mxu0 0.0
        %1175 = vmatpush1.xpose.msra.mxu0 0.0
        %1176 = vmatprep.subr.mxu0 0.0
        %1177 = vmatpush1.xpose.msra.mxu0 0.0
        %1178 = vmatprep.subr.mxu0 0.0
        %1179 = vmatpush1.xpose.msra.mxu0 0.0
        %1180 = vmatprep.subr.mxu0 0.0
        %1181 = vmatpush1.xpose.msra.mxu0 0.0
        %1182 = vmatprep.subr.mxu0 0.0
        %1183 = vmatpush1.xpose.msra.mxu0 0.0
        %1184 = vmatprep.subr.mxu0 0.0
        %1185 = vmatpush1.xpose.msra.mxu0 0.0
        %1186 = vmatprep.subr.mxu0 0.0
        %1187 = vmatpush1.xpose.msra.mxu0 0.0
        %1188 = vmatprep.subr.mxu0 0.0
        %1189 = vmatpush1.xpose.msra.mxu0 0.0
        %1190 = vmatprep.subr.mxu0 0.0
        %1191 = vmatpush1.xpose.msra.mxu0 0.0
        %1192 = vmatprep.subr.mxu0 0.0
        %1193 = vmatpush1.xpose.msra.mxu0 0.0
        %1194 = vmatprep.subr.mxu0 0.0
        %1195 = vmatpush1.xpose.msra.mxu0 0.0
        %1196 = vmatprep.subr.mxu0 0.0
        %1197 = vmatpush1.xpose.msra.mxu0 0.0
        %1198 = vmatprep.subr.mxu0 0.0
        %1199 = vmatpush1.xpose.msra.mxu0 0.0
        %1200 = vmatprep.subr.mxu0 0.0
        %1201 = vmatpush1.xpose.msra.mxu0 0.0
        %1202 = vmatprep.subr.mxu0 0.0
        %1203 = vmatpush1.xpose.msra.mxu0 0.0
        %1204 = vmatprep.subr.mxu0 0.0
        %1205 = vmatpush1.xpose.msra.mxu0 0.0
        %1206 = vmatprep.subr.mxu0 0.0
        %1207 = vmatpush1.xpose.msra.mxu0 0.0
        %1208 = vmatprep.subr.mxu0 0.0
        %1209 = vmatpush1.xpose.msra.mxu0 0.0
        %1210 = vmatprep.subr.mxu0 0.0
        %1211 = vmatpush1.xpose.msra.mxu0 0.0
        %1212 = vmatprep.mubr.f32.mxu0 0.0
        %1213 = vmatmul.mubr.f32.gmra.mrb[0].mxu0 %v1140
        %v1214 = vpop.f32.mrb[0].mxu0
        %v1215 = vadd.f32 0.0, %v1214
        %v1216 = vpop.f32.mrb[0].mxu0
        %1217 = vmatprep.mubr.f32.mxu0 0.0
        %1218 = vmatmul.mubr.f32.gmra.mrb[0].mxu0 %v1142
        %v1219 = vpop.f32.mrb[0].mxu0
        %v1220 = vadd.f32 0.0, %v1219
        %v1221 = vpop.f32.mrb[0].mxu0
        %1222 = vdwg.mxu0
        %v1223 = vsel %vm523, %v1215, -1e+09
        %v1224 = vsel %vm524, %v1220, -1e+09
        %v1225 = vsel %vm531, %v1223, -inf
        %1226 = vmax.xlane.f32.xlu0 %v1225
        %v1227 = vpop.xlane.xlu0 %1226
        %v1228 = vsel %vm531, %v1224, -inf
        %1229 = vmax.xlane.f32.xlu0 %v1228
        %v1230 = vpop.xlane.xlu0 %1229
        %v1231 = vsub.f32 %v1223, %v1227
        %v1232 = vsub.f32 %v1224, %v1230
        %v1233 = vmul.f32 %v1231, 1.442695
        %v1234 = vpow.pop %v1233
        %v1235 = vmul.f32 %v1232, 1.442695
        %v1236 = vpow.pop %v1235
        %v1237 = vsel %vm531, %v1234, 0.0
        %1238 = vadd.xlane.f32.xlu0 %v1237
        %v1239 = vpop.xlane.xlu0 %1238
        %v1240 = vsel %vm531, %v1236, 0.0
        %1241 = vadd.xlane.f32.xlu0 %v1240
        %v1242 = vpop.xlane.xlu0 %1241
        %1243 = vrot.lane.b32.xlu0 %v503, 80
        %v1244 = vpop.permute.xlu0 %1243
        %1245 = vrot.lane.b32.xlu0 %v509, 80
        %v1246 = vpop.permute.xlu0 %1245
        %v1250 = vsel %vm531, %v1234, 0
        %v1253 = vsel %vm531, %v1236, 0
        %1255 = vmatprep.subr.mxu0 0.0
        %1256 = vmatpush1.msra.mxu0 %v1244
        %1257 = vmatprep.subr.mxu0 0.0
        %1258 = vmatpush1.msra.mxu0 %v1246
        %1259 = vmatprep.subr.mxu0 0.0
        %1260 = vmatpush1.msra.mxu0 0.0
        %1261 = vmatprep.subr.mxu0 0.0
        %1262 = vmatpush1.msra.mxu0 0.0
        %1263 = vmatprep.subr.mxu0 0.0
        %1264 = vmatpush1.msra.mxu0 0.0
        %1265 = vmatprep.subr.mxu0 0.0
        %1266 = vmatpush1.msra.mxu0 0.0
        %1267 = vmatprep.subr.mxu0 0.0
        %1268 = vmatpush1.msra.mxu0 0.0
        %1269 = vmatprep.subr.mxu0 0.0
        %1270 = vmatpush1.msra.mxu0 0.0
        %1271 = vmatprep.subr.mxu0 0.0
        %1272 = vmatpush1.msra.mxu0 0.0
        %1273 = vmatprep.subr.mxu0 0.0
        %1274 = vmatpush1.msra.mxu0 0.0
        %1275 = vmatprep.subr.mxu0 0.0
        %1276 = vmatpush1.msra.mxu0 0.0
        %1277 = vmatprep.subr.mxu0 0.0
        %1278 = vmatpush1.msra.mxu0 0.0
        %1279 = vmatprep.subr.mxu0 0.0
        %1280 = vmatpush1.msra.mxu0 0.0
        %1281 = vmatprep.subr.mxu0 0.0
        %1282 = vmatpush1.msra.mxu0 0.0
        %1283 = vmatprep.subr.mxu0 0.0
        %1284 = vmatpush1.msra.mxu0 0.0
        %1285 = vmatprep.subr.mxu0 0.0
        %1286 = vmatpush1.msra.mxu0 0.0
        %1287 = vmatprep.subr.mxu0 0.0
        %1288 = vmatpush1.msra.mxu0 0.0
        %1289 = vmatprep.subr.mxu0 0.0
        %1290 = vmatpush1.msra.mxu0 0.0
        %1291 = vmatprep.subr.mxu0 0.0
        %1292 = vmatpush1.msra.mxu0 0.0
        %1293 = vmatprep.subr.mxu0 0.0
        %1294 = vmatpush1.msra.mxu0 0.0
        %1295 = vmatprep.subr.mxu0 0.0
        %1296 = vmatpush1.msra.mxu0 0.0
        %1297 = vmatprep.subr.mxu0 0.0
        %1298 = vmatpush1.msra.mxu0 0.0
        %1299 = vmatprep.subr.mxu0 0.0
        %1300 = vmatpush1.msra.mxu0 0.0
        %1301 = vmatprep.subr.mxu0 0.0
        %1302 = vmatpush1.msra.mxu0 0.0
        %1303 = vmatprep.subr.mxu0 0.0
        %1304 = vmatpush1.msra.mxu0 0.0
        %1305 = vmatprep.subr.mxu0 0.0
        %1306 = vmatpush1.msra.mxu0 0.0
        %1307 = vmatprep.subr.mxu0 0.0
        %1308 = vmatpush1.msra.mxu0 0.0
        %1309 = vmatprep.subr.mxu0 0.0
        %1310 = vmatpush1.msra.mxu0 0.0
        %1311 = vmatprep.subr.mxu0 0.0
        %1312 = vmatpush1.msra.mxu0 0.0
        %1313 = vmatprep.subr.mxu0 0.0
        %1314 = vmatpush1.msra.mxu0 0.0
        %1315 = vmatprep.subr.mxu0 0.0
        %1316 = vmatpush1.msra.mxu0 0.0
        %1317 = vmatprep.subr.mxu0 0.0
        %1318 = vmatpush1.msra.mxu0 0.0
        %1319 = vmatprep.mubr.f32.mxu0 0.0
        %1320 = vmatmul.mubr.f32.gmra.mrb[0].mxu0 %v1250
        %v1321 = vpop.f32.mrb[0].mxu0
        %v1322 = vadd.f32 0.0, %v1321
        %v1323 = vpop.f32.mrb[0].mxu0
        %1324 = vmatprep.mubr.f32.mxu0 0.0
        %1325 = vmatmul.mubr.f32.gmra.mrb[0].mxu0 %v1253
        %v1326 = vpop.f32.mrb[0].mxu0
        %v1327 = vadd.f32 0.0, %v1326
        %v1328 = vpop.f32.mrb[0].mxu0
        %1329 = vdwg.mxu0
        %v1330 = vrcp.pop %v1239
        %v1331 = vmul.f32 1.0, %v1330
        %v1332 = vrcp.pop %v1242
        %v1333 = vmul.f32 1.0, %v1332
        %v1334 = vmul.f32 %v1322, %v1331
        %v1335 = vmul.f32 %v1327, %v1333
        %1338 = vrot.lane.b32.xlu0 %v926, 16
        %v1339 = vpop.permute.xlu0 %1338
        %1340 = vrot.lane.b32.xlu0 %v927, 16
        %v1341 = vpop.permute.xlu0 %1340
        %1346 = vrot.lane.b32.xlu0 %v1130, 32
        %v1347 = vpop.permute.xlu0 %1346
        %1348 = vrot.lane.b32.xlu0 %v1131, 32
        %v1349 = vpop.permute.xlu0 %1348
        %1354 = vrot.lane.b32.xlu0 %v1334, 48
        %v1355 = vpop.permute.xlu0 %1354
        %1356 = vrot.lane.b32.xlu0 %v1335, 48
        %v1357 = vpop.permute.xlu0 %1356
        %v1360 = vsel %vm531, %v720, %v1339
        %v1361 = vsel %vm531, %v721, %v1341
        %vm1362 = vcmask 261120
        %v1363 = vsel %vm1362, %v1360, %v1347
        %v1364 = vsel %vm1362, %v1361, %v1349
        %vm1365 = vcmask 392192
        %v1366 = vsel %vm1365, %v1363, %v1355
        %v1367 = vsel %vm1365, %v1364, %v1357
        %v1368 = vld [vmem:[#allocation8] sm:$0xff]
        %v1369 = vld [vmem:[#allocation8 + $0x8] sm:$0xff]
        %v1370 = vld [vmem:[#allocation8 + $0x10] sm:$0xff]
        %v1371 = vld [vmem:[#allocation8 + $0x18] sm:$0xff]
        %v1372 = vld [vmem:[#allocation8 + $0x20] sm:$0xff]
        %v1373 = vld [vmem:[#allocation8 + $0x28] sm:$0xff]
        %v1374 = vld [vmem:[#allocation8 + $0x30] sm:$0xff]
        %v1375 = vld [vmem:[#allocation8 + $0x38] sm:$0xff]
        %v1376 = vld [vmem:[#allocation10] sm:$0x1]
        %v1378 = vlaneseq
        %v1379 = vshrl.u32 %v1378, 7
        %v1380 = vsub.s32 0, %v1379
        %v1381 = vrot.slane %v1376, %v1380
        %v1384 = vsel %vm427, %v1366, 0
        %v1387 = vsel %vm427, %v1367, 0
        %1389 = vmatprep.subr.mxu0 0.0
        %1390 = vmatpush1.msra.mxu0 %v1368
        %1391 = vmatprep.subr.mxu0 0.0
        %1392 = vmatpush1.msra.mxu0 %v1369
        %1393 = vmatprep.subr.mxu0 0.0
        %1394 = vmatpush1.msra.mxu0 %v1370
        %1395 = vmatprep.subr.mxu0 0.0
        %1396 = vmatpush1.msra.mxu0 %v1371
        %1397 = vmatprep.subr.mxu0 0.0
        %1398 = vmatpush1.msra.mxu0 %v1372
        %1399 = vmatprep.subr.mxu0 0.0
        %1400 = vmatpush1.msra.mxu0 %v1373
        %1401 = vmatprep.subr.mxu0 0.0
        %1402 = vmatpush1.msra.mxu0 %v1374
        %1403 = vmatprep.subr.mxu0 0.0
        %1404 = vmatpush1.msra.mxu0 %v1375
        %1405 = vmatprep.subr.mxu0 0.0
        %1406 = vmatpush1.msra.mxu0 0.0
        %1407 = vmatprep.subr.mxu0 0.0
        %1408 = vmatpush1.msra.mxu0 0.0
        %1409 = vmatprep.subr.mxu0 0.0
        %1410 = vmatpush1.msra.mxu0 0.0
        %1411 = vmatprep.subr.mxu0 0.0
        %1412 = vmatpush1.msra.mxu0 0.0
        %1413 = vmatprep.subr.mxu0 0.0
        %1414 = vmatpush1.msra.mxu0 0.0
        %1415 = vmatprep.subr.mxu0 0.0
        %1416 = vmatpush1.msra.mxu0 0.0
        %1417 = vmatprep.subr.mxu0 0.0
        %1418 = vmatpush1.msra.mxu0 0.0
        %1419 = vmatprep.subr.mxu0 0.0
        %1420 = vmatpush1.msra.mxu0 0.0
        %1421 = vmatprep.subr.mxu0 0.0
        %1422 = vmatpush1.msra.mxu0 0.0
        %1423 = vmatprep.subr.mxu0 0.0
        %1424 = vmatpush1.msra.mxu0 0.0
        %1425 = vmatprep.subr.mxu0 0.0
        %1426 = vmatpush1.msra.mxu0 0.0
        %1427 = vmatprep.subr.mxu0 0.0
        %1428 = vmatpush1.msra.mxu0 0.0
        %1429 = vmatprep.subr.mxu0 0.0
        %1430 = vmatpush1.msra.mxu0 0.0
        %1431 = vmatprep.subr.mxu0 0.0
        %1432 = vmatpush1.msra.mxu0 0.0
        %1433 = vmatprep.subr.mxu0 0.0
        %1434 = vmatpush1.msra.mxu0 0.0
        %1435 = vmatprep.subr.mxu0 0.0
        %1436 = vmatpush1.msra.mxu0 0.0
        %1437 = vmatprep.subr.mxu0 0.0
        %1438 = vmatpush1.msra.mxu0 0.0
        %1439 = vmatprep.subr.mxu0 0.0
        %1440 = vmatpush1.msra.mxu0 0.0
        %1441 = vmatprep.subr.mxu0 0.0
        %1442 = vmatpush1.msra.mxu0 0.0
        %1443 = vmatprep.subr.mxu0 0.0
        %1444 = vmatpush1.msra.mxu0 0.0
        %1445 = vmatprep.subr.mxu0 0.0
        %1446 = vmatpush1.msra.mxu0 0.0
        %1447 = vmatprep.subr.mxu0 0.0
        %1448 = vmatpush1.msra.mxu0 0.0
        %1449 = vmatprep.subr.mxu0 0.0
        %1450 = vmatpush1.msra.mxu0 0.0
        %1451 = vmatprep.subr.mxu0 0.0
        %1452 = vmatpush1.msra.mxu0 0.0
        %1453 = vmatprep.mubr.f32.mxu0 0.0
        %1454 = vmatmul.mubr.f32.gmra.mrb[0].mxu0 %v1384
        %v1455 = vpop.f32.mrb[0].mxu0
        %v1456 = vadd.f32 %v1381, %v1455
        %v1457 = vpop.f32.mrb[0].mxu0
        %1458 = vmatprep.mubr.f32.mxu0 0.0
        %1459 = vmatmul.mubr.f32.gmra.mrb[0].mxu0 %v1387
        %v1460 = vpop.f32.mrb[0].mxu0
        %v1461 = vadd.f32 %v1381, %v1460
        %v1462 = vpop.f32.mrb[0].mxu0
        %1463 = vdwg.mxu0
        %1464 = vst.msk [vmem:[%s396] sm:$0xff] %vm427, %v1456
        %1465 = vst.msk [vmem:[%s396 + $0x8] sm:$0xff] %vm427, %v1461
        %s1466 = sand.u32 %s192, 1
        %s1467 = scalar_lea.sflag [#allocation4], %s1466
        %s1468 = sand.u32 %s192, 1
        %s1469 = smul.addr %s1468, 16
        %s1470 = scalar_lea.vmem [#allocation14], %s1469
        // Predicated region
        $region77: #{tpu_custom_call.1} parent=47 // pred_check
          %p1471 = pneg %p202
        $region78: #{tpu_custom_call.1} parent=47 // pred_check_branch
          %1473 = sbr.rel (%p1471) target = $region80
        $region79: #{tpu_custom_call.1} parent=47 // pred_region
          %s1475 = ssub.s32 256, 256
          %1476 = vsyncadd %s1467, %s1475
          %s1477 = smul.addr %s27, 2
          %s1478 = smul.addr %s1477, 128
          %s1479 = scalar_lea.hbm %s7, %s1478
          %s1480 = sshll.u32 %s1470, 4
          %s1481 = int_to_ptr.vmem [resolvable:$true] %s1480
          %1486 = dma.vmem_to_hbm [thread:$0]  %s1481, 256, %s1479, %s1467, 128, 128, 8
        $region80: #{tpu_custom_call.1} parent=47 // pred_fallthru
          _
      $region48: #{tpu_custom_call.1} parent=5 // pred_fallthru
        _
      %p1487 = scmp.le.s32.totalorder 2, %s22
      // Predicated region
      $region81: #{tpu_custom_call.1} parent=5 // pred_check
        %p1488 = pneg %p1487
      $region82: #{tpu_custom_call.1} parent=5 // pred_check_branch
        %1490 = sbr.rel (%p1488) target = $region84
      $region83: #{tpu_custom_call.1} parent=5 // pred_region
        %s1491 = ssub.s32 %s22, 2
        // Predicated region
        $region85: #{tpu_custom_call.1} parent=83 // pred_check
          %p1492 = pneg %p208
        $region86: #{tpu_custom_call.1} parent=83 // pred_check_branch
          %1494 = sbr.rel (%p1492) target = $region88
        $region87: #{tpu_custom_call.1} parent=83 // pred_region
          %s1495 = sand.u32 %s193, 1
          %s1496 = scalar_lea.sflag [#allocation4], %s1495
          %s1497 = sand.u32 %s193, 1
          %s1498 = smul.addr %s1497, 16
          %s1499 = scalar_lea.vmem [#allocation14], %s1498
          %1500 = dma.done %s1496, 256
        $region88: #{tpu_custom_call.1} parent=83 // pred_fallthru
          _
      $region84: #{tpu_custom_call.1} parent=5 // pred_fallthru
        _
    $region6: #{tpu_custom_call.1} parent=1 // loop_footer
      %s26 = sadd.s32 1, %s22
    $region7: #{tpu_custom_call.1} parent=1 // loop_footer_branch
      %21 = sbr.rel target = $region3
    $region8: #{tpu_custom_call.1} parent=1 // loop_exit
      _
    %1501 = vsyncpa [#allocation3], 1
    %s1502 = scalar_lea.sflag [#allocation3], 1
    %1503 = vsyncpa %s1502, 1
    %1504 = vsyncpa [#allocation6], 1
    %1505 = vsyncpa [#allocation9], 1
    %1506 = vsyncpa [#allocation12], 1
    %1507 = vsyncpa [#allocation4], 1
    %s1508 = scalar_lea.sflag [#allocation4], 1
    %1509 = vsyncpa %s1508, 1

</llo_original>
